<compile_context>
chip_gen: v5e
topology: v5e:2x2
jax: 0.10.0
libtpu: 0.0.40
codegen_flags: <defaults>
</compile_context>

<pallas_src>
import math
from functools import partial

import jax
import jax.numpy as jnp
from jax.experimental import pallas as pl
from jax.experimental.pallas import tpu as pltpu

# ---------------- configuration (small, consistent with the module) ----------
BATCH = 2
SEQ = 16          # stands in for seq_len=197
EMBED = 64        # stands in for embed_dim=192
NUM_HEADS = 4
HEAD_DIM = EMBED // NUM_HEADS
MLP_RATIO = 4.0
MLP_HIDDEN = int(EMBED * MLP_RATIO)
EPS = 1e-6
MASK_NEG = -1.0e8


def _layernorm(x, gamma, beta):
    mu = jnp.mean(x, axis=-1, keepdims=True)
    var = jnp.mean((x - mu) ** 2, axis=-1, keepdims=True)
    return (x - mu) * jax.lax.rsqrt(var + EPS) * gamma + beta


def _gelu_exact(x):
    # torch.nn.GELU() default = exact erf-based GELU (kept for semantics).
    # TODO(synk): if erf expands to a VPU polynomial in the bundle dump and the
    #             tolerance allows, switch to the tanh-approx (single EUP tanh).
    return 0.5 * x * (1.0 + jax.lax.erf(x * (1.0 / math.sqrt(2.0))))


# ------------------------------ Pallas kernel --------------------------------
def avit_layer_kernel(
    h_ref, mrow_ref, mkey_ref,
    wqkv_ref, bqkv_ref, wo_ref, bo_ref,
    g1_ref, b1_ref, g2_ref, b2_ref,
    w1_ref, bm1_ref, w2_ref, bm2_ref,
    out_ref,
    *, num_heads, softmax_exp_bf16,
):
    Bb, S, E = h_ref.shape
    H = num_heads
    Dh = E // H
    HB = H * Bb
    R = Bb * S

    x = h_ref[...].reshape(R, E)              # (R, E)  f32 hidden states
    m = mrow_ref[...].reshape(R, 1)           # (R, 1)  token-keep mask

    # ----- attention branch: norm_before(x*m)*m, fused bf16 QKV projection ----
    # Wqkv columns are packed head-major: [q_h, k_h, v_h] per head; the 1/sqrt(Dh)
    # softmax scale is pre-folded into the Q columns/bias on the host.
    xn = _layernorm(x * m, g1_ref[...], b1_ref[...]) * m
    qkv = jnp.dot(xn.astype(jnp.bfloat16), wqkv_ref[...],
                  preferred_element_type=jnp.float32) + bqkv_ref[...]   # (R, 3E)

    # Single head relayout of the fused qkv tensor -> (H*Bb, S, 3*Dh).
    qkv3 = qkv.reshape(Bb, S, 3 * E)
    head_parts = jnp.split(qkv3, H, axis=-1)                 # H x (Bb, S, 3Dh)
    qkvh = jnp.stack(head_parts, axis=0).reshape(HB, S, 3 * Dh)
    qh = qkvh[:, :, 0 * Dh:1 * Dh].astype(jnp.bfloat16)       # (HB, S, Dh)
    kh = qkvh[:, :, 1 * Dh:2 * Dh].astype(jnp.bfloat16)
    vh = qkvh[:, :, 2 * Dh:3 * Dh].astype(jnp.bfloat16)

    # Scores, head-batched: (HB, S, S) f32 accumulation on the MXU.
    s = jnp.einsum("bqd,bkd->bqk", qh, kh, preferred_element_type=jnp.float32)

    # Additive key bias (1 - mask) * -1e8; added via a free leading-dim reshape
    # with implicit broadcasting (no explicit broadcast_to materialization).
    bias = (1.0 - mkey_ref[...]) * MASK_NEG                   # (Bb, 1, S)
    s = (s.reshape(H, Bb, S, S) + bias[None]).reshape(HB, S, S)

    # Softmax: f32 max-subtraction; exp in bf16 on v6e/v7x (bf16 VPU/EUP),
    # f32 on v5e.  Denominator accumulated in f32, applied once to ctx.
    s = s - jnp.max(s, axis=-1, keepdims=True)
    if softmax_exp_bf16:
        s = s.astype(jnp.bfloat16)
    p = jnp.exp(s)
    denom = jnp.sum(p.astype(jnp.float32), axis=-1, keepdims=True)    # (HB, S, 1)

    ctx = jnp.einsum("bqk,bkd->bqd", p.astype(jnp.bfloat16), vh,
                     preferred_element_type=jnp.float32)              # (HB, S, Dh)
    ctx = ctx * pl.reciprocal(denom, approx=True)

    # Merge heads back into lanes (one lane-concat) and do a single dense
    # (R, E) @ (E, E) output projection (full-depth MXU contraction).
    ctx_cat = jnp.concatenate(jnp.split(ctx, H, axis=0), axis=-1)     # (Bb, S, E)
    attn_out = jnp.dot(ctx_cat.reshape(R, E).astype(jnp.bfloat16), wo_ref[...],
                       preferred_element_type=jnp.float32) + bo_ref[...]

    h1 = x + attn_out        # residual (StochasticDepth = identity in eval)

    # ----- MLP branch: norm_after(h1*m)*m -> Linear / GELU / Linear ----------
    yn = _layernorm(h1 * m, g2_ref[...], b2_ref[...]) * m
    z = jnp.dot(yn.astype(jnp.bfloat16), w1_ref[...],
                preferred_element_type=jnp.float32) + bm1_ref[...]
    z = _gelu_exact(z)
    z = jnp.dot(z.astype(jnp.bfloat16), w2_ref[...],
                preferred_element_type=jnp.float32) + bm2_ref[...]

    out_ref[...] = (h1 + z).reshape(Bb, S, E)


# ------------------------------ wrapper ---------------------------------------
def pack_params(p):
    """Host-side (one-time) packing: fuse QKV head-major, fold softmax scale into
    the Q columns, cast matmul weights to bf16 (biases / LayerNorm stay f32)."""
    scale = 1.0 / math.sqrt(HEAD_DIM)
    wq, wk, wv = p["wq"] * scale, p["wk"], p["wv"]
    bq, bk, bv = p["bq"] * scale, p["bk"], p["bv"]
    w_cols, b_cols = [], []
    for h in range(NUM_HEADS):
        sl = slice(h * HEAD_DIM, (h + 1) * HEAD_DIM)
        w_cols += [wq[:, sl], wk[:, sl], wv[:, sl]]
        b_cols += [bq[:, sl], bk[:, sl], bv[:, sl]]
    wqkv = jnp.concatenate(w_cols, axis=1)      # (E, 3E), head-major columns
    bqkv = jnp.concatenate(b_cols, axis=1)      # (1, 3E)
    return dict(
        wqkv=wqkv.astype(jnp.bfloat16), bqkv=bqkv,
        wo=p["wo"].astype(jnp.bfloat16), bo=p["bo"],
        ln1_g=p["ln1_g"], ln1_b=p["ln1_b"],
        ln2_g=p["ln2_g"], ln2_b=p["ln2_b"],
        w1=p["w1"].astype(jnp.bfloat16), bm1=p["bm1"],
        w2=p["w2"].astype(jnp.bfloat16), bm2=p["bm2"],
    )


def avit_layer(hidden_states, mask, packed, *, num_grid_blocks=1,
               softmax_exp_bf16=None, vmem_limit_bytes=None):
    """num_grid_blocks=1 (default): whole batch in one step -> largest MXU M and no
    per-step pipeline overhead (right choice on single-TC v5e/v6e, and for toy
    shapes on v7x too).  Pass num_grid_blocks=2 on v7x for large configs to use
    both TensorCores, and set vmem_limit_bytes explicitly there (64 MiB physical
    VMEM on v7x, half of v5e/v6e)."""
    B, S, E = hidden_states.shape
    assert B % num_grid_blocks == 0
    Bb = B // num_grid_blocks

    if softmax_exp_bf16 is None:
        # bf16 exp only where the VPU/EUP support bf16 (v6e / v7x); f32 on v5e.
        try:
            kind = jax.devices()[0].device_kind.lower()
        except Exception:
            kind = ""
        softmax_exp_bf16 = any(t in kind for t in ("v6", "v7", "7x"))

    mask_row = mask[:, :, None]     # (B, S, 1)
    mask_key = mask[:, None, :]     # (B, 1, S)

    weight_names = ("wqkv", "bqkv", "wo", "bo",
                    "ln1_g", "ln1_b", "ln2_g", "ln2_b",
                    "w1", "bm1", "w2", "bm2")
    weights = [packed[k] for k in weight_names]

    def full_spec(arr):
        return pl.BlockSpec(arr.shape, lambda b, _nd=arr.ndim: (0,) * _nd)

    in_specs = [
        pl.BlockSpec((Bb, S, E), lambda b: (b, 0, 0)),
        pl.BlockSpec((Bb, S, 1), lambda b: (b, 0, 0)),
        pl.BlockSpec((Bb, 1, S), lambda b: (b, 0, 0)),
    ] + [full_spec(w) for w in weights]

    out_spec = pl.BlockSpec((Bb, S, E), lambda b: (b, 0, 0))

    kernel = partial(avit_layer_kernel, num_heads=NUM_HEADS,
                     softmax_exp_bf16=softmax_exp_bf16)

    return pl.pallas_call(
        kernel,
        out_shape=jax.ShapeDtypeStruct((B, S, E), jnp.float32),
        grid=(num_grid_blocks,),
        in_specs=in_specs,
        out_specs=out_spec,
        compiler_params=pltpu.CompilerParams(
            dimension_semantics=("parallel",),
            vmem_limit_bytes=vmem_limit_bytes),
    )(hidden_states, mask_row, mask_key, *weights)


# ---------------- pure-JAX f32 reference (for correctness check) -------------
def avit_layer_ref(h, mask, p):
    B, S, E = h.shape
    m_r = mask[:, :, None]
    xn = _layernorm(h * m_r, p["ln1_g"], p["ln1_b"]) * m_r
    q = xn @ p["wq"] + p["bq"]
    k = xn @ p["wk"] + p["bk"]
    v = xn @ p["wv"] + p["bv"]

    def heads(t):
        return t.reshape(B, S, NUM_HEADS, HEAD_DIM).transpose(0, 2, 1, 3)

    qh, kh, vh = heads(q), heads(k), heads(v)
    bias = ((1.0 - mask) * MASK_NEG)[:, None, None, :]
    s = jnp.einsum("bhqd,bhkd->bhqk", qh, kh) / math.sqrt(HEAD_DIM) + bias
    pmat = jax.nn.softmax(s, axis=-1)
    ctx = jnp.einsum("bhqk,bhkd->bhqd", pmat, vh)
    ctx = ctx.transpose(0, 2, 1, 3).reshape(B, S, E)
    h1 = h + ctx @ p["wo"] + p["bo"]

    yn = _layernorm(h1 * m_r, p["ln2_g"], p["ln2_b"]) * m_r
    z = _gelu_exact(yn @ p["w1"] + p["bm1"]) @ p["w2"] + p["bm2"]
    return h1 + z


def init_params(key):
    ks = jax.random.split(key, 6)

    def lin(k, fan_in, fan_out):
        bound = 1.0 / math.sqrt(fan_in)
        kw, kb = jax.random.split(k)
        w = jax.random.uniform(kw, (fan_in, fan_out), jnp.float32, -bound, bound)
        b = jax.random.uniform(kb, (1, fan_out), jnp.float32, -bound, bound)
        return w, b

    wq, bq = lin(ks[0], EMBED, EMBED)
    wk, bk = lin(ks[1], EMBED, EMBED)
    wv, bv = lin(ks[2], EMBED, EMBED)
    wo, bo = lin(ks[3], EMBED, EMBED)
    w1, bm1 = lin(ks[4], EMBED, MLP_HIDDEN)
    w2, bm2 = lin(ks[5], MLP_HIDDEN, EMBED)
    return dict(
        wq=wq, bq=bq, wk=wk, bk=bk, wv=wv, bv=bv, wo=wo, bo=bo,
        ln1_g=jnp.ones((1, EMBED), jnp.float32), ln1_b=jnp.zeros((1, EMBED), jnp.float32),
        ln2_g=jnp.ones((1, EMBED), jnp.float32), ln2_b=jnp.zeros((1, EMBED), jnp.float32),
        w1=w1, bm1=bm1, w2=w2, bm2=bm2,
    )


if __name__ == "__main__":
    key = jax.random.PRNGKey(0)
    k_h, k_m, k_p = jax.random.split(key, 3)

    hidden_states = jax.random.normal(k_h, (BATCH, SEQ, EMBED), jnp.float32)
    # binary token mask (1 = active token), first token always active
    mask = jax.random.bernoulli(k_m, 0.7, (BATCH, SEQ)).astype(jnp.float32)
    mask = mask.at[:, 0].set(1.0)

    params = init_params(k_p)
    packed = pack_params(params)

    out = avit_layer(hidden_states, mask, packed)
    out = jax.block_until_ready(out)

    ref = avit_layer_ref(hidden_states, mask, params)
    assert out.shape == (BATCH, SEQ, EMBED)
    max_err = float(jnp.max(jnp.abs(out - ref)))
    # bf16 matmul operands + (bf16 exp on v6e/v7x) + approx reciprocal -> looser
    # tolerance than pure f32.
    assert jnp.allclose(out, ref, rtol=3e-2, atol=3e-2), max_err

    print("KERNEL_OK")
</pallas_src>

<mosaic_0001>
module attributes {stable_mosaic.version = 11 : i64} {
  func.func @avit_layer_kernel(%arg0: i32, %arg1: memref<2x16x64xf32, #tpu.memory_space<vmem>>, %arg2: memref<2x16x1xf32, #tpu.memory_space<vmem>>, %arg3: memref<2x1x16xf32, #tpu.memory_space<vmem>>, %arg4: memref<64x192xbf16, #tpu.memory_space<vmem>>, %arg5: memref<1x192xf32, #tpu.memory_space<vmem>>, %arg6: memref<64x64xbf16, #tpu.memory_space<vmem>>, %arg7: memref<1x64xf32, #tpu.memory_space<vmem>>, %arg8: memref<1x64xf32, #tpu.memory_space<vmem>>, %arg9: memref<1x64xf32, #tpu.memory_space<vmem>>, %arg10: memref<1x64xf32, #tpu.memory_space<vmem>>, %arg11: memref<1x64xf32, #tpu.memory_space<vmem>>, %arg12: memref<64x256xbf16, #tpu.memory_space<vmem>>, %arg13: memref<1x256xf32, #tpu.memory_space<vmem>>, %arg14: memref<256x64xbf16, #tpu.memory_space<vmem>>, %arg15: memref<1x64xf32, #tpu.memory_space<vmem>>, %arg16: memref<2x16x64xf32, #tpu.memory_space<vmem>>) attributes {dimension_semantics = [#tpu.dimension_semantics<parallel>], iteration_bounds = array<i64: 1>, scalar_prefetch = 0 : i64, scratch_operands = 0 : i64, tpu.core_type = #tpu.core_type<tc>, window_params = [{transform_indices = @transform_0, window_bounds = array<i64: 2, 16, 64>}, {transform_indices = @transform_1, window_bounds = array<i64: 2, 16, 1>}, {transform_indices = @transform_2, window_bounds = array<i64: 2, 1, 16>}, {pipeline_mode = #tpu.pipeline_mode<synchronous>, transform_indices = @transform_3, window_bounds = array<i64: 64, 192>}, {pipeline_mode = #tpu.pipeline_mode<synchronous>, transform_indices = @transform_4, window_bounds = array<i64: 1, 192>}, {pipeline_mode = #tpu.pipeline_mode<synchronous>, transform_indices = @transform_5, window_bounds = array<i64: 64, 64>}, {pipeline_mode = #tpu.pipeline_mode<synchronous>, transform_indices = @transform_6, window_bounds = array<i64: 1, 64>}, {pipeline_mode = #tpu.pipeline_mode<synchronous>, transform_indices = @transform_7, window_bounds = array<i64: 1, 64>}, {pipeline_mode = #tpu.pipeline_mode<synchronous>, transform_indices = @transform_8, window_bounds = array<i64: 1, 64>}, {pipeline_mode = #tpu.pipeline_mode<synchronous>, transform_indices = @transform_9, window_bounds = array<i64: 1, 64>}, {pipeline_mode = #tpu.pipeline_mode<synchronous>, transform_indices = @transform_10, window_bounds = array<i64: 1, 64>}, {pipeline_mode = #tpu.pipeline_mode<synchronous>, transform_indices = @transform_11, window_bounds = array<i64: 64, 256>}, {pipeline_mode = #tpu.pipeline_mode<synchronous>, transform_indices = @transform_12, window_bounds = array<i64: 1, 256>}, {pipeline_mode = #tpu.pipeline_mode<synchronous>, transform_indices = @transform_13, window_bounds = array<i64: 256, 64>}, {pipeline_mode = #tpu.pipeline_mode<synchronous>, transform_indices = @transform_14, window_bounds = array<i64: 1, 64>}, {transform_indices = @transform_15, window_bounds = array<i64: 2, 16, 64>}]} {
    %c0 = arith.constant 0 : index
    %c0_0 = arith.constant 0 : index
    %c0_1 = arith.constant 0 : index
    %0 = vector.load %arg1[%c0, %c0_0, %c0_1] : memref<2x16x64xf32, #tpu.memory_space<vmem>>, vector<2x16x64xf32>
    %1 = vector.shape_cast %0 : vector<2x16x64xf32> to vector<32x64xf32>
    %c0_2 = arith.constant 0 : index
    %c0_3 = arith.constant 0 : index
    %c0_4 = arith.constant 0 : index
    %2 = vector.load %arg2[%c0_2, %c0_3, %c0_4] : memref<2x16x1xf32, #tpu.memory_space<vmem>>, vector<2x16x1xf32>
    %3 = vector.shape_cast %2 : vector<2x16x1xf32> to vector<32x1xf32>
    %4 = vector.broadcast %3 : vector<32x1xf32> to vector<32x64xf32>
    %5 = arith.mulf %1, %4 : vector<32x64xf32>
    %c0_5 = arith.constant 0 : index
    %c0_6 = arith.constant 0 : index
    %6 = vector.load %arg8[%c0_5, %c0_6] : memref<1x64xf32, #tpu.memory_space<vmem>>, vector<1x64xf32>
    %c0_7 = arith.constant 0 : index
    %c0_8 = arith.constant 0 : index
    %7 = vector.load %arg9[%c0_7, %c0_8] : memref<1x64xf32, #tpu.memory_space<vmem>>, vector<1x64xf32>
    %cst = arith.constant dense<0.000000e+00> : vector<32xf32>
    %8 = vector.multi_reduction <add>, %5, %cst [1] : vector<32x64xf32> to vector<32xf32>
    %9 = vector.shape_cast %8 : vector<32xf32> to vector<32x1xf32>
    %cst_9 = arith.constant 6.400000e+01 : f32
    %10 = vector.broadcast %cst_9 : f32 to vector<32x1xf32>
    %11 = arith.divf %9, %10 : vector<32x1xf32>
    %12 = vector.broadcast %11 : vector<32x1xf32> to vector<32x64xf32>
    %13 = arith.subf %5, %12 : vector<32x64xf32>
    %14 = arith.mulf %13, %13 : vector<32x64xf32>
    %cst_10 = arith.constant dense<0.000000e+00> : vector<32xf32>
    %15 = vector.multi_reduction <add>, %14, %cst_10 [1] : vector<32x64xf32> to vector<32xf32>
    %16 = vector.shape_cast %15 : vector<32xf32> to vector<32x1xf32>
    %cst_11 = arith.constant 6.400000e+01 : f32
    %17 = vector.broadcast %cst_11 : f32 to vector<32x1xf32>
    %18 = arith.divf %16, %17 : vector<32x1xf32>
    %19 = vector.broadcast %11 : vector<32x1xf32> to vector<32x64xf32>
    %20 = arith.subf %5, %19 : vector<32x64xf32>
    %cst_12 = arith.constant 9.99999997E-7 : f32
    %21 = vector.broadcast %cst_12 : f32 to vector<32x1xf32>
    %22 = arith.addf %18, %21 : vector<32x1xf32>
    %23 = math.rsqrt %22 : vector<32x1xf32>
    %24 = vector.broadcast %23 : vector<32x1xf32> to vector<32x64xf32>
    %25 = arith.mulf %20, %24 : vector<32x64xf32>
    %26 = vector.broadcast %6 : vector<1x64xf32> to vector<32x64xf32>
    %27 = arith.mulf %25, %26 : vector<32x64xf32>
    %28 = vector.broadcast %7 : vector<1x64xf32> to vector<32x64xf32>
    %29 = arith.addf %27, %28 : vector<32x64xf32>
    %30 = vector.broadcast %3 : vector<32x1xf32> to vector<32x64xf32>
    %31 = arith.mulf %29, %30 : vector<32x64xf32>
    %32 = arith.truncf %31 : vector<32x64xf32> to vector<32x64xbf16>
    %c0_13 = arith.constant 0 : index
    %c0_14 = arith.constant 0 : index
    %33 = vector.load %arg4[%c0_13, %c0_14] : memref<64x192xbf16, #tpu.memory_space<vmem>>, vector<64x192xbf16>
    %cst_15 = arith.constant dense<0.000000e+00> : vector<32x192xf32>
    %34 = tpu.matmul %32, %33, %cst_15 {dimension_numbers = #tpu.dot_dimension_numbers<[1], [0], [0], [1], [0, 0, 1, 1], [], []>} : vector<32x64xbf16>, vector<64x192xbf16>, vector<32x192xf32> -> vector<32x192xf32>
    %c0_16 = arith.constant 0 : index
    %c0_17 = arith.constant 0 : index
    %35 = vector.load %arg5[%c0_16, %c0_17] : memref<1x192xf32, #tpu.memory_space<vmem>>, vector<1x192xf32>
    %36 = vector.broadcast %35 : vector<1x192xf32> to vector<32x192xf32>
    %37 = arith.addf %34, %36 : vector<32x192xf32>
    %38 = vector.shape_cast %37 : vector<32x192xf32> to vector<2x16x192xf32>
    %39 = vector.extract_strided_slice %38 {offsets = [0, 0, 0], sizes = [2, 16, 48], strides = [1, 1, 1]} : vector<2x16x192xf32> to vector<2x16x48xf32>
    %40 = vector.extract_strided_slice %38 {offsets = [0, 0, 48], sizes = [2, 16, 48], strides = [1, 1, 1]} : vector<2x16x192xf32> to vector<2x16x48xf32>
    %41 = vector.extract_strided_slice %38 {offsets = [0, 0, 96], sizes = [2, 16, 48], strides = [1, 1, 1]} : vector<2x16x192xf32> to vector<2x16x48xf32>
    %42 = vector.extract_strided_slice %38 {offsets = [0, 0, 144], sizes = [2, 16, 48], strides = [1, 1, 1]} : vector<2x16x192xf32> to vector<2x16x48xf32>
    %43 = vector.shape_cast %39 : vector<2x16x48xf32> to vector<1x2x16x48xf32>
    %44 = vector.shape_cast %40 : vector<2x16x48xf32> to vector<1x2x16x48xf32>
    %45 = vector.shape_cast %41 : vector<2x16x48xf32> to vector<1x2x16x48xf32>
    %46 = vector.shape_cast %42 : vector<2x16x48xf32> to vector<1x2x16x48xf32>
    %47 = tpu.concatenate %43, %44, %45, %46 in 0 : vector<1x2x16x48xf32>, vector<1x2x16x48xf32>, vector<1x2x16x48xf32>, vector<1x2x16x48xf32> -> vector<4x2x16x48xf32>
    %48 = vector.shape_cast %47 : vector<4x2x16x48xf32> to vector<8x16x48xf32>
    %49 = vector.extract_strided_slice %48 {offsets = [0, 0, 0], sizes = [8, 16, 16], strides = [1, 1, 1]} : vector<8x16x48xf32> to vector<8x16x16xf32>
    %50 = arith.truncf %49 : vector<8x16x16xf32> to vector<8x16x16xbf16>
    %51 = vector.extract_strided_slice %48 {offsets = [0, 0, 16], sizes = [8, 16, 16], strides = [1, 1, 1]} : vector<8x16x48xf32> to vector<8x16x16xf32>
    %52 = arith.truncf %51 : vector<8x16x16xf32> to vector<8x16x16xbf16>
    %53 = vector.extract_strided_slice %48 {offsets = [0, 0, 32], sizes = [8, 16, 16], strides = [1, 1, 1]} : vector<8x16x48xf32> to vector<8x16x16xf32>
    %54 = arith.truncf %53 : vector<8x16x16xf32> to vector<8x16x16xbf16>
    "tpu.trace_start"() <{level = 10 : i32, message = "bqd,bkd->bqk"}> : () -> ()
    %cst_18 = arith.constant dense<0.000000e+00> : vector<8x16x16xf32>
    %55 = tpu.matmul %50, %52, %cst_18 {dimension_numbers = #tpu.dot_dimension_numbers<[2], [2], [1], [1], [0, 0, 0, 1, 1, 1], [0], [0]>} : vector<8x16x16xbf16>, vector<8x16x16xbf16>, vector<8x16x16xf32> -> vector<8x16x16xf32>
    "tpu.trace_stop"() : () -> ()
    %c0_19 = arith.constant 0 : index
    %c0_20 = arith.constant 0 : index
    %c0_21 = arith.constant 0 : index
    %56 = vector.load %arg3[%c0_19, %c0_20, %c0_21] : memref<2x1x16xf32, #tpu.memory_space<vmem>>, vector<2x1x16xf32>
    %cst_22 = arith.constant 1.000000e+00 : f32
    %57 = vector.broadcast %cst_22 : f32 to vector<2x1x16xf32>
    %58 = arith.subf %57, %56 : vector<2x1x16xf32>
    %cst_23 = arith.constant -1.000000e+08 : f32
    %59 = vector.broadcast %cst_23 : f32 to vector<2x1x16xf32>
    %60 = arith.mulf %58, %59 : vector<2x1x16xf32>
    %61 = vector.shape_cast %55 : vector<8x16x16xf32> to vector<4x2x16x16xf32>
    %62 = vector.shape_cast %60 : vector<2x1x16xf32> to vector<1x2x1x16xf32>
    %63 = vector.broadcast %62 : vector<1x2x1x16xf32> to vector<4x2x16x16xf32>
    %64 = arith.addf %61, %63 : vector<4x2x16x16xf32>
    %65 = vector.shape_cast %64 : vector<4x2x16x16xf32> to vector<8x16x16xf32>
    %cst_24 = arith.constant dense<0xFF800000> : vector<8x16xf32>
    %66 = vector.multi_reduction <maximumf>, %65, %cst_24 [2] : vector<8x16x16xf32> to vector<8x16xf32>
    %67 = vector.shape_cast %66 : vector<8x16xf32> to vector<8x16x1xf32>
    %68 = vector.broadcast %67 : vector<8x16x1xf32> to vector<8x16x16xf32>
    %69 = arith.subf %65, %68 : vector<8x16x16xf32>
    %70 = math.exp %69 : vector<8x16x16xf32>
    %cst_25 = arith.constant dense<0.000000e+00> : vector<8x16xf32>
    %71 = vector.multi_reduction <add>, %70, %cst_25 [2] : vector<8x16x16xf32> to vector<8x16xf32>
    %72 = vector.shape_cast %71 : vector<8x16xf32> to vector<8x16x1xf32>
    %73 = arith.truncf %70 : vector<8x16x16xf32> to vector<8x16x16xbf16>
    "tpu.trace_start"() <{level = 10 : i32, message = "bqk,bkd->bqd"}> : () -> ()
    %cst_26 = arith.constant dense<0.000000e+00> : vector<8x16x16xf32>
    %74 = tpu.matmul %73, %54, %cst_26 {dimension_numbers = #tpu.dot_dimension_numbers<[2], [1], [1], [2], [0, 0, 0, 1, 1, 2], [0], [0]>} : vector<8x16x16xbf16>, vector<8x16x16xbf16>, vector<8x16x16xf32> -> vector<8x16x16xf32>
    "tpu.trace_stop"() : () -> ()
    %75 = tpu.reciprocal %72 {approx = true} : vector<8x16x1xf32> -> vector<8x16x1xf32>
    %76 = vector.broadcast %75 : vector<8x16x1xf32> to vector<8x16x16xf32>
    %77 = arith.mulf %74, %76 : vector<8x16x16xf32>
    %78 = vector.extract_strided_slice %77 {offsets = [0, 0, 0], sizes = [2, 16, 16], strides = [1, 1, 1]} : vector<8x16x16xf32> to vector<2x16x16xf32>
    %79 = vector.extract_strided_slice %77 {offsets = [2, 0, 0], sizes = [2, 16, 16], strides = [1, 1, 1]} : vector<8x16x16xf32> to vector<2x16x16xf32>
    %80 = vector.extract_strided_slice %77 {offsets = [4, 0, 0], sizes = [2, 16, 16], strides = [1, 1, 1]} : vector<8x16x16xf32> to vector<2x16x16xf32>
    %81 = vector.extract_strided_slice %77 {offsets = [6, 0, 0], sizes = [2, 16, 16], strides = [1, 1, 1]} : vector<8x16x16xf32> to vector<2x16x16xf32>
    %82 = tpu.concatenate %78, %79, %80, %81 in 2 : vector<2x16x16xf32>, vector<2x16x16xf32>, vector<2x16x16xf32>, vector<2x16x16xf32> -> vector<2x16x64xf32>
    %83 = vector.shape_cast %82 : vector<2x16x64xf32> to vector<32x64xf32>
    %84 = arith.truncf %83 : vector<32x64xf32> to vector<32x64xbf16>
    %c0_27 = arith.constant 0 : index
    %c0_28 = arith.constant 0 : index
    %85 = vector.load %arg6[%c0_27, %c0_28] : memref<64x64xbf16, #tpu.memory_space<vmem>>, vector<64x64xbf16>
    %cst_29 = arith.constant dense<0.000000e+00> : vector<32x64xf32>
    %86 = tpu.matmul %84, %85, %cst_29 {dimension_numbers = #tpu.dot_dimension_numbers<[1], [0], [0], [1], [0, 0, 1, 1], [], []>} : vector<32x64xbf16>, vector<64x64xbf16>, vector<32x64xf32> -> vector<32x64xf32>
    %c0_30 = arith.constant 0 : index
    %c0_31 = arith.constant 0 : index
    %87 = vector.load %arg7[%c0_30, %c0_31] : memref<1x64xf32, #tpu.memory_space<vmem>>, vector<1x64xf32>
    %88 = vector.broadcast %87 : vector<1x64xf32> to vector<32x64xf32>
    %89 = arith.addf %86, %88 : vector<32x64xf32>
    %90 = arith.addf %1, %89 : vector<32x64xf32>
    %91 = vector.broadcast %3 : vector<32x1xf32> to vector<32x64xf32>
    %92 = arith.mulf %90, %91 : vector<32x64xf32>
    %c0_32 = arith.constant 0 : index
    %c0_33 = arith.constant 0 : index
    %93 = vector.load %arg10[%c0_32, %c0_33] : memref<1x64xf32, #tpu.memory_space<vmem>>, vector<1x64xf32>
    %c0_34 = arith.constant 0 : index
    %c0_35 = arith.constant 0 : index
    %94 = vector.load %arg11[%c0_34, %c0_35] : memref<1x64xf32, #tpu.memory_space<vmem>>, vector<1x64xf32>
    %cst_36 = arith.constant dense<0.000000e+00> : vector<32xf32>
    %95 = vector.multi_reduction <add>, %92, %cst_36 [1] : vector<32x64xf32> to vector<32xf32>
    %96 = vector.shape_cast %95 : vector<32xf32> to vector<32x1xf32>
    %cst_37 = arith.constant 6.400000e+01 : f32
    %97 = vector.broadcast %cst_37 : f32 to vector<32x1xf32>
    %98 = arith.divf %96, %97 : vector<32x1xf32>
    %99 = vector.broadcast %98 : vector<32x1xf32> to vector<32x64xf32>
    %100 = arith.subf %92, %99 : vector<32x64xf32>
    %101 = arith.mulf %100, %100 : vector<32x64xf32>
    %cst_38 = arith.constant dense<0.000000e+00> : vector<32xf32>
    %102 = vector.multi_reduction <add>, %101, %cst_38 [1] : vector<32x64xf32> to vector<32xf32>
    %103 = vector.shape_cast %102 : vector<32xf32> to vector<32x1xf32>
    %cst_39 = arith.constant 6.400000e+01 : f32
    %104 = vector.broadcast %cst_39 : f32 to vector<32x1xf32>
    %105 = arith.divf %103, %104 : vector<32x1xf32>
    %106 = vector.broadcast %98 : vector<32x1xf32> to vector<32x64xf32>
    %107 = arith.subf %92, %106 : vector<32x64xf32>
    %cst_40 = arith.constant 9.99999997E-7 : f32
    %108 = vector.broadcast %cst_40 : f32 to vector<32x1xf32>
    %109 = arith.addf %105, %108 : vector<32x1xf32>
    %110 = math.rsqrt %109 : vector<32x1xf32>
    %111 = vector.broadcast %110 : vector<32x1xf32> to vector<32x64xf32>
    %112 = arith.mulf %107, %111 : vector<32x64xf32>
    %113 = vector.broadcast %93 : vector<1x64xf32> to vector<32x64xf32>
    %114 = arith.mulf %112, %113 : vector<32x64xf32>
    %115 = vector.broadcast %94 : vector<1x64xf32> to vector<32x64xf32>
    %116 = arith.addf %114, %115 : vector<32x64xf32>
    %117 = vector.broadcast %3 : vector<32x1xf32> to vector<32x64xf32>
    %118 = arith.mulf %116, %117 : vector<32x64xf32>
    %119 = arith.truncf %118 : vector<32x64xf32> to vector<32x64xbf16>
    %c0_41 = arith.constant 0 : index
    %c0_42 = arith.constant 0 : index
    %120 = vector.load %arg12[%c0_41, %c0_42] : memref<64x256xbf16, #tpu.memory_space<vmem>>, vector<64x256xbf16>
    %cst_43 = arith.constant dense<0.000000e+00> : vector<32x256xf32>
    %121 = tpu.matmul %119, %120, %cst_43 {dimension_numbers = #tpu.dot_dimension_numbers<[1], [0], [0], [1], [0, 0, 1, 1], [], []>} : vector<32x64xbf16>, vector<64x256xbf16>, vector<32x256xf32> -> vector<32x256xf32>
    %c0_44 = arith.constant 0 : index
    %c0_45 = arith.constant 0 : index
    %122 = vector.load %arg13[%c0_44, %c0_45] : memref<1x256xf32, #tpu.memory_space<vmem>>, vector<1x256xf32>
    %123 = vector.broadcast %122 : vector<1x256xf32> to vector<32x256xf32>
    %124 = arith.addf %121, %123 : vector<32x256xf32>
    %cst_46 = arith.constant 5.000000e-01 : f32
    %125 = vector.broadcast %cst_46 : f32 to vector<32x256xf32>
    %126 = arith.mulf %125, %124 : vector<32x256xf32>
    %cst_47 = arith.constant 0.707106769 : f32
    %127 = vector.broadcast %cst_47 : f32 to vector<32x256xf32>
    %128 = arith.mulf %124, %127 : vector<32x256xf32>
    %129 = math.erf %128 : vector<32x256xf32>
    %cst_48 = arith.constant 1.000000e+00 : f32
    %130 = vector.broadcast %cst_48 : f32 to vector<32x256xf32>
    %131 = arith.addf %130, %129 : vector<32x256xf32>
    %132 = arith.mulf %126, %131 : vector<32x256xf32>
    %133 = arith.truncf %132 : vector<32x256xf32> to vector<32x256xbf16>
    %c0_49 = arith.constant 0 : index
    %c0_50 = arith.constant 0 : index
    %134 = vector.load %arg14[%c0_49, %c0_50] : memref<256x64xbf16, #tpu.memory_space<vmem>>, vector<256x64xbf16>
    %cst_51 = arith.constant dense<0.000000e+00> : vector<32x64xf32>
    %135 = tpu.matmul %133, %134, %cst_51 {dimension_numbers = #tpu.dot_dimension_numbers<[1], [0], [0], [1], [0, 0, 1, 1], [], []>} : vector<32x256xbf16>, vector<256x64xbf16>, vector<32x64xf32> -> vector<32x64xf32>
    %c0_52 = arith.constant 0 : index
    %c0_53 = arith.constant 0 : index
    %136 = vector.load %arg15[%c0_52, %c0_53] : memref<1x64xf32, #tpu.memory_space<vmem>>, vector<1x64xf32>
    %137 = vector.broadcast %136 : vector<1x64xf32> to vector<32x64xf32>
    %138 = arith.addf %135, %137 : vector<32x64xf32>
    %139 = arith.addf %90, %138 : vector<32x64xf32>
    %140 = vector.shape_cast %139 : vector<32x64xf32> to vector<2x16x64xf32>
    %c0_54 = arith.constant 0 : index
    %c0_55 = arith.constant 0 : index
    %c0_56 = arith.constant 0 : index
    %141 = vector.load %arg16[%c0_54, %c0_55, %c0_56] : memref<2x16x64xf32, #tpu.memory_space<vmem>>, vector<2x16x64xf32>
    tpu.vector_store %arg16[%c0_54, %c0_55, %c0_56], %140 {strides = array<i32>} : memref<2x16x64xf32, #tpu.memory_space<vmem>>, vector<2x16x64xf32>,
    return
  }
  func.func @transform_0(%arg0: i32) -> (i32, i32, i32) {
    %c0_i32 = arith.constant 0 : i32
    %c0_i32_0 = arith.constant 0 : i32
    %c0_i32_1 = arith.constant 0 : i32
    return %arg0, %c0_i32, %c0_i32_0 : i32, i32, i32
  }
  func.func @transform_1(%arg0: i32) -> (i32, i32, i32) {
    %c0_i32 = arith.constant 0 : i32
    %c0_i32_0 = arith.constant 0 : i32
    %c0_i32_1 = arith.constant 0 : i32
    return %arg0, %c0_i32, %c0_i32_0 : i32, i32, i32
  }
  func.func @transform_2(%arg0: i32) -> (i32, i32, i32) {
    %c0_i32 = arith.constant 0 : i32
    %c0_i32_0 = arith.constant 0 : i32
    %c0_i32_1 = arith.constant 0 : i32
    return %arg0, %c0_i32, %c0_i32_0 : i32, i32, i32
  }
  func.func @transform_3(%arg0: i32) -> (i32, i32) {
    %c0_i32 = arith.constant 0 : i32
    %c0_i32_0 = arith.constant 0 : i32
    %c0_i32_1 = arith.constant 0 : i32
    return %c0_i32, %c0_i32_0 : i32, i32
  }
  func.func @transform_4(%arg0: i32) -> (i32, i32) {
    %c0_i32 = arith.constant 0 : i32
    %c0_i32_0 = arith.constant 0 : i32
    %c0_i32_1 = arith.constant 0 : i32
    return %c0_i32, %c0_i32_0 : i32, i32
  }
  func.func @transform_5(%arg0: i32) -> (i32, i32) {
    %c0_i32 = arith.constant 0 : i32
    %c0_i32_0 = arith.constant 0 : i32
    %c0_i32_1 = arith.constant 0 : i32
    return %c0_i32, %c0_i32_0 : i32, i32
  }
  func.func @transform_6(%arg0: i32) -> (i32, i32) {
    %c0_i32 = arith.constant 0 : i32
    %c0_i32_0 = arith.constant 0 : i32
    %c0_i32_1 = arith.constant 0 : i32
    return %c0_i32, %c0_i32_0 : i32, i32
  }
  func.func @transform_7(%arg0: i32) -> (i32, i32) {
    %c0_i32 = arith.constant 0 : i32
    %c0_i32_0 = arith.constant 0 : i32
    %c0_i32_1 = arith.constant 0 : i32
    return %c0_i32, %c0_i32_0 : i32, i32
  }
  func.func @transform_8(%arg0: i32) -> (i32, i32) {
    %c0_i32 = arith.constant 0 : i32
    %c0_i32_0 = arith.constant 0 : i32
    %c0_i32_1 = arith.constant 0 : i32
    return %c0_i32, %c0_i32_0 : i32, i32
  }
  func.func @transform_9(%arg0: i32) -> (i32, i32) {
    %c0_i32 = arith.constant 0 : i32
    %c0_i32_0 = arith.constant 0 : i32
    %c0_i32_1 = arith.constant 0 : i32
    return %c0_i32, %c0_i32_0 : i32, i32
  }
  func.func @transform_10(%arg0: i32) -> (i32, i32) {
    %c0_i32 = arith.constant 0 : i32
    %c0_i32_0 = arith.constant 0 : i32
    %c0_i32_1 = arith.constant 0 : i32
    return %c0_i32, %c0_i32_0 : i32, i32
  }
  func.func @transform_11(%arg0: i32) -> (i32, i32) {
    %c0_i32 = arith.constant 0 : i32
    %c0_i32_0 = arith.constant 0 : i32
    %c0_i32_1 = arith.constant 0 : i32
    return %c0_i32, %c0_i32_0 : i32, i32
  }
  func.func @transform_12(%arg0: i32) -> (i32, i32) {
    %c0_i32 = arith.constant 0 : i32
    %c0_i32_0 = arith.constant 0 : i32
    %c0_i32_1 = arith.constant 0 : i32
    return %c0_i32, %c0_i32_0 : i32, i32
  }
  func.func @transform_13(%arg0: i32) -> (i32, i32) {
    %c0_i32 = arith.constant 0 : i32
    %c0_i32_0 = arith.constant 0 : i32
    %c0_i32_1 = arith.constant 0 : i32
    return %c0_i32, %c0_i32_0 : i32, i32
  }
  func.func @transform_14(%arg0: i32) -> (i32, i32) {
    %c0_i32 = arith.constant 0 : i32
    %c0_i32_0 = arith.constant 0 : i32
    %c0_i32_1 = arith.constant 0 : i32
    return %c0_i32, %c0_i32_0 : i32, i32
  }
  func.func @transform_15(%arg0: i32) -> (i32, i32, i32) {
    %c0_i32 = arith.constant 0 : i32
    %c0_i32_0 = arith.constant 0 : i32
    %c0_i32_1 = arith.constant 0 : i32
    return %arg0, %c0_i32, %c0_i32_0 : i32, i32, i32
  }
}

</mosaic_0001>

<llo_original>
// kernel: tpu_custom_call.1
$region0: #{tpu_custom_call.1}
  #allocation0 [shape = 'u32[]', space=smem, size = 0x4, offset = 0x4, fixed_abs, tag = 'smem constant byte address 0x4 - core index']
  #allocation1 [shape = 'u32[72,128]{1,0:T(1,128)}', space=vmem, size = 0x9000, scoped, tag = 'internal scratch']
  %s0 = inlined_call_operand.vmem [shape: f32[2,16,64], index: 0, kind: input, shape index: {}]
  %s1 = inlined_call_operand.vmem [shape: f32[2,16,1], index: 1, kind: input, shape index: {}]
  %s2 = inlined_call_operand.vmem [shape: f32[2,1,16], index: 2, kind: input, shape index: {}]
  %s3 = inlined_call_operand.vmem [shape: bf16[64,192], index: 3, kind: input, shape index: {}]
  %s4 = inlined_call_operand.vmem [shape: f32[1,192], index: 4, kind: input, shape index: {}]
  %s5 = inlined_call_operand.vmem [shape: bf16[64,64], index: 5, kind: input, shape index: {}]
  %s6 = inlined_call_operand.vmem [shape: f32[1,64], index: 6, kind: input, shape index: {}]
  %s7 = inlined_call_operand.vmem [shape: f32[1,64], index: 7, kind: input, shape index: {}]
  %s8 = inlined_call_operand.vmem [shape: f32[1,64], index: 8, kind: input, shape index: {}]
  %s9 = inlined_call_operand.vmem [shape: f32[1,64], index: 9, kind: input, shape index: {}]
  %s10 = inlined_call_operand.vmem [shape: f32[1,64], index: 10, kind: input, shape index: {}]
  %s11 = inlined_call_operand.vmem [shape: bf16[64,256], index: 11, kind: input, shape index: {}]
  %s12 = inlined_call_operand.vmem [shape: f32[1,256], index: 12, kind: input, shape index: {}]
  %s13 = inlined_call_operand.vmem [shape: bf16[256,64], index: 13, kind: input, shape index: {}]
  %s14 = inlined_call_operand.vmem [shape: f32[1,64], index: 14, kind: input, shape index: {}]
  %s15 = inlined_call_operand.hbm [shape: f32[2,16,64], index: 15, kind: output, shape index: {}]
  %s16 = sld [smem:[#allocation0]]
  $region70: #{tpu_custom_call.1} parent=0
    _
  %s18 = ssub.s32 1, %s16
  %s19 = scalar_select 0, %s18, %s16
  $region1: #{tpu_custom_call.1} parent=0
    #allocation2 [shape = 'u8[16384]{0}', space=vmem, size = 0x4000, scoped, tag = 'output window, operand 0, single buffered']
    #allocation3 [shape = 's32[1]{0}', space=sflag, size = 0x4, scoped, tag = 'scoped memory for tpu_custom_call.1']
    %20 = vsyncpa [#allocation3], 0
    // Predicated region
    $region2: #{tpu_custom_call.1} parent=1 // pred_check
      _
    $region3: #{tpu_custom_call.1} parent=1 // pred_check_branch
      %22 = sbr.rel (0) target = $region5
    $region4: #{tpu_custom_call.1} parent=1 // pred_region
      _
    $region5: #{tpu_custom_call.1} parent=1 // pred_fallthru
      _
    // Predicated region
    $region6: #{tpu_custom_call.1} parent=1 // pred_check
      _
    $region7: #{tpu_custom_call.1} parent=1 // pred_check_branch
      %24 = sbr.rel (0) target = $region9
    $region8: #{tpu_custom_call.1} parent=1 // pred_region
      _
    $region9: #{tpu_custom_call.1} parent=1 // pred_fallthru
      _
    // Predicated region
    $region10: #{tpu_custom_call.1} parent=1 // pred_check
      _
    $region11: #{tpu_custom_call.1} parent=1 // pred_check_branch
      %26 = sbr.rel (0) target = $region13
    $region12: #{tpu_custom_call.1} parent=1 // pred_region
      _
    $region13: #{tpu_custom_call.1} parent=1 // pred_fallthru
      _
    // Predicated region
    $region14: #{tpu_custom_call.1} parent=1 // pred_check
      _
    $region15: #{tpu_custom_call.1} parent=1 // pred_check_branch
      %28 = sbr.rel (0) target = $region17
    $region16: #{tpu_custom_call.1} parent=1 // pred_region
      _
    $region17: #{tpu_custom_call.1} parent=1 // pred_fallthru
      _
    // Predicated region
    $region18: #{tpu_custom_call.1} parent=1 // pred_check
      _
    $region19: #{tpu_custom_call.1} parent=1 // pred_check_branch
      %30 = sbr.rel (0) target = $region21
    $region20: #{tpu_custom_call.1} parent=1 // pred_region
      _
    $region21: #{tpu_custom_call.1} parent=1 // pred_fallthru
      _
    // Predicated region
    $region22: #{tpu_custom_call.1} parent=1 // pred_check
      _
    $region23: #{tpu_custom_call.1} parent=1 // pred_check_branch
      %32 = sbr.rel (0) target = $region25
    $region24: #{tpu_custom_call.1} parent=1 // pred_region
      _
    $region25: #{tpu_custom_call.1} parent=1 // pred_fallthru
      _
    // Predicated region
    $region26: #{tpu_custom_call.1} parent=1 // pred_check
      _
    $region27: #{tpu_custom_call.1} parent=1 // pred_check_branch
      %34 = sbr.rel (0) target = $region29
    $region28: #{tpu_custom_call.1} parent=1 // pred_region
      _
    $region29: #{tpu_custom_call.1} parent=1 // pred_fallthru
      _
    // Predicated region
    $region30: #{tpu_custom_call.1} parent=1 // pred_check
      _
    $region31: #{tpu_custom_call.1} parent=1 // pred_check_branch
      %36 = sbr.rel (0) target = $region33
    $region32: #{tpu_custom_call.1} parent=1 // pred_region
      _
    $region33: #{tpu_custom_call.1} parent=1 // pred_fallthru
      _
    // Predicated region
    $region34: #{tpu_custom_call.1} parent=1 // pred_check
      _
    $region35: #{tpu_custom_call.1} parent=1 // pred_check_branch
      %38 = sbr.rel (0) target = $region37
    $region36: #{tpu_custom_call.1} parent=1 // pred_region
      _
    $region37: #{tpu_custom_call.1} parent=1 // pred_fallthru
      _
    // Predicated region
    $region38: #{tpu_custom_call.1} parent=1 // pred_check
      _
    $region39: #{tpu_custom_call.1} parent=1 // pred_check_branch
      %40 = sbr.rel (0) target = $region41
    $region40: #{tpu_custom_call.1} parent=1 // pred_region
      _
    $region41: #{tpu_custom_call.1} parent=1 // pred_fallthru
      _
    // Predicated region
    $region42: #{tpu_custom_call.1} parent=1 // pred_check
      _
    $region43: #{tpu_custom_call.1} parent=1 // pred_check_branch
      %42 = sbr.rel (0) target = $region45
    $region44: #{tpu_custom_call.1} parent=1 // pred_region
      _
    $region45: #{tpu_custom_call.1} parent=1 // pred_fallthru
      _
    // Predicated region
    $region46: #{tpu_custom_call.1} parent=1 // pred_check
      _
    $region47: #{tpu_custom_call.1} parent=1 // pred_check_branch
      %44 = sbr.rel (0) target = $region49
    $region48: #{tpu_custom_call.1} parent=1 // pred_region
      _
    $region49: #{tpu_custom_call.1} parent=1 // pred_fallthru
      _
    // Predicated region
    $region50: #{tpu_custom_call.1} parent=1 // pred_check
      _
    $region51: #{tpu_custom_call.1} parent=1 // pred_check_branch
      %46 = sbr.rel (0) target = $region53
    $region52: #{tpu_custom_call.1} parent=1 // pred_region
      _
    $region53: #{tpu_custom_call.1} parent=1 // pred_fallthru
      _
    // Predicated region
    $region54: #{tpu_custom_call.1} parent=1 // pred_check
      _
    $region55: #{tpu_custom_call.1} parent=1 // pred_check_branch
      %48 = sbr.rel (0) target = $region57
    $region56: #{tpu_custom_call.1} parent=1 // pred_region
      _
    $region57: #{tpu_custom_call.1} parent=1 // pred_fallthru
      _
    // Predicated region
    $region58: #{tpu_custom_call.1} parent=1 // pred_check
      _
    $region59: #{tpu_custom_call.1} parent=1 // pred_check_branch
      %50 = sbr.rel (0) target = $region61
    $region60: #{tpu_custom_call.1} parent=1 // pred_region
      _
    $region61: #{tpu_custom_call.1} parent=1 // pred_fallthru
      _
    %v52 = vld [vmem:[%s0] sm:$0xff]
    %v53 = vld [vmem:[%s0 + $0x8] sm:$0xff]
    %v54 = vld [vmem:[%s0 + $0x10] sm:$0xff]
    %v55 = vld [vmem:[%s0 + $0x18] sm:$0xff]
    %v56 = vld [vmem:[%s1] sm:$0xff]
    %v57 = vld [vmem:[%s1 + $0x8] sm:$0xff]
    %v58 = vld [vmem:[%s1 + $0x10] sm:$0xff]
    %v59 = vld [vmem:[%s1 + $0x18] sm:$0xff]
    %61 = vset.pattern.permute.xlu0 0
    %62 = vperm.xlu0 %61, %v56
    %v63 = vpop.permute.xlu0 %62
    %66 = vset.pattern.permute.xlu0 0
    %67 = vperm.xlu0 %66, %v57
    %v68 = vpop.permute.xlu0 %67
    %71 = vset.pattern.permute.xlu0 0
    %72 = vperm.xlu0 %71, %v58
    %v73 = vpop.permute.xlu0 %72
    %76 = vset.pattern.permute.xlu0 0
    %77 = vperm.xlu0 %76, %v59
    %v78 = vpop.permute.xlu0 %77
    %v80 = vmul.f32 %v52, %v63
    %v81 = vmul.f32 %v53, %v68
    %v82 = vmul.f32 %v54, %v73
    %v83 = vmul.f32 %v55, %v78
    %v84 = vld [vmem:[%s7] sm:$0x1]
    %v85 = vld [vmem:[%s8] sm:$0x1]
    %vm86 = vcmask 523264
    %v87 = vsel %vm86, %v80, 0.0
    %88 = vadd.xlane.f32.xlu0 %v87
    %v89 = vpop.xlane.xlu0 %88
    %v90 = vsel %vm86, %v81, 0.0
    %91 = vadd.xlane.f32.xlu0 %v90
    %v92 = vpop.xlane.xlu0 %91
    %v93 = vsel %vm86, %v82, 0.0
    %94 = vadd.xlane.f32.xlu0 %v93
    %v95 = vpop.xlane.xlu0 %94
    %v96 = vsel %vm86, %v83, 0.0
    %97 = vadd.xlane.f32.xlu0 %v96
    %v98 = vpop.xlane.xlu0 %97
    %v99 = vrcp.pop 64.0
    %v100 = vmul.f32 64.0, %v99
    %v101 = vsub.f32 1.0, %v100
    %v102 = vmul.f32 %v99, %v101
    %v103 = vadd.f32 %v99, %v102
    %vm104 = vweird.f32 %v99
    %v105 = vsel %vm104, %v99, %v103
    %v106 = vmul.f32 %v89, %v105
    %v107 = vmul.f32 %v92, %v105
    %v108 = vmul.f32 %v95, %v105
    %v109 = vmul.f32 %v98, %v105
    %v110 = vsub.f32 %v80, %v106
    %v111 = vsub.f32 %v81, %v107
    %v112 = vsub.f32 %v82, %v108
    %v113 = vsub.f32 %v83, %v109
    %v114 = vmul.f32 %v110, %v110
    %v115 = vmul.f32 %v111, %v111
    %v116 = vmul.f32 %v112, %v112
    %v117 = vmul.f32 %v113, %v113
    %v118 = vsel %vm86, %v114, 0.0
    %119 = vadd.xlane.f32.xlu0 %v118
    %v120 = vpop.xlane.xlu0 %119
    %v121 = vsel %vm86, %v115, 0.0
    %122 = vadd.xlane.f32.xlu0 %v121
    %v123 = vpop.xlane.xlu0 %122
    %v124 = vsel %vm86, %v116, 0.0
    %125 = vadd.xlane.f32.xlu0 %v124
    %v126 = vpop.xlane.xlu0 %125
    %v127 = vsel %vm86, %v117, 0.0
    %128 = vadd.xlane.f32.xlu0 %v127
    %v129 = vpop.xlane.xlu0 %128
    %v130 = vmul.f32 %v120, %v105
    %v131 = vmul.f32 %v123, %v105
    %v132 = vmul.f32 %v126, %v105
    %v133 = vmul.f32 %v129, %v105
    %v134 = vadd.f32 %v130, 1e-06
    %v135 = vadd.f32 %v131, 1e-06
    %v136 = vadd.f32 %v132, 1e-06
    %v137 = vadd.f32 %v133, 1e-06
    %v138 = vrsqrt.pop %v134
    %v139 = vmul.f32 %v138, %v134
    %v140 = vmul.f32 %v139, %v138
    %v141 = vmul.f32 0.5, %v140
    %v142 = vsub.f32 1.5, %v141
    %v143 = vmul.f32 %v138, %v142
    %vm144 = vweird.f32 %v134
    %vm145 = vweird.f32 %v138
    %vm146 = vmor %vm144, %vm145
    %v147 = vsel %vm146, %v138, %v143
    %v148 = vrsqrt.pop %v135
    %v149 = vmul.f32 %v148, %v135
    %v150 = vmul.f32 %v149, %v148
    %v151 = vmul.f32 0.5, %v150
    %v152 = vsub.f32 1.5, %v151
    %v153 = vmul.f32 %v148, %v152
    %vm154 = vweird.f32 %v135
    %vm155 = vweird.f32 %v148
    %vm156 = vmor %vm154, %vm155
    %v157 = vsel %vm156, %v148, %v153
    %v158 = vrsqrt.pop %v136
    %v159 = vmul.f32 %v158, %v136
    %v160 = vmul.f32 %v159, %v158
    %v161 = vmul.f32 0.5, %v160
    %v162 = vsub.f32 1.5, %v161
    %v163 = vmul.f32 %v158, %v162
    %vm164 = vweird.f32 %v136
    %vm165 = vweird.f32 %v158
    %vm166 = vmor %vm164, %vm165
    %v167 = vsel %vm166, %v158, %v163
    %v168 = vrsqrt.pop %v137
    %v169 = vmul.f32 %v168, %v137
    %v170 = vmul.f32 %v169, %v168
    %v171 = vmul.f32 0.5, %v170
    %v172 = vsub.f32 1.5, %v171
    %v173 = vmul.f32 %v168, %v172
    %vm174 = vweird.f32 %v137
    %vm175 = vweird.f32 %v168
    %vm176 = vmor %vm174, %vm175
    %v177 = vsel %vm176, %v168, %v173
    %v178 = vmul.f32 %v110, %v147
    %v179 = vmul.f32 %v111, %v157
    %v180 = vmul.f32 %v112, %v167
    %v181 = vmul.f32 %v113, %v177
    %v183 = vperm.slane %v84, 0
    %v185 = vmul.f32 %v178, %v183
    %v186 = vmul.f32 %v179, %v183
    %v187 = vmul.f32 %v180, %v183
    %v188 = vmul.f32 %v181, %v183
    %v190 = vperm.slane %v85, 0
    %v192 = vadd.f32 %v185, %v190
    %v193 = vadd.f32 %v186, %v190
    %v194 = vadd.f32 %v187, %v190
    %v195 = vadd.f32 %v188, %v190
    %v196 = vmul.f32 %v192, %v63
    %v197 = vmul.f32 %v193, %v68
    %v198 = vmul.f32 %v194, %v73
    %v199 = vmul.f32 %v195, %v78
    %v200 = vpack.c.bf16 %v197, %v196
    %v201 = vpack.c.bf16 %v199, %v198
    %v202 = vld [vmem:[%s3] sm:$0xff]
    %v203 = vld [vmem:[%s3 + $0x8] sm:$0xff]
    %v204 = vld [vmem:[%s3 + $0x10] sm:$0xff]
    %v205 = vld [vmem:[%s3 + $0x18] sm:$0xff]
    %v206 = vld [vmem:[%s3 + $0x20] sm:$0xff]
    %v207 = vld [vmem:[%s3 + $0x28] sm:$0xff]
    %v208 = vld [vmem:[%s3 + $0x30] sm:$0xff]
    %v209 = vld [vmem:[%s3 + $0x38] sm:$0xff]
    %v210 = vld [vmem:[%s4] sm:$0x3]
    %v212 = vperm.slane %v210, 0
    %v213 = vperm.slane %v210, 1
    %v224 = vunpack.c.l.b16 %v202
    %v225 = vunpack.c.h.b16 %v202
    %v226 = vunpack.c.l.b16 %v203
    %v227 = vunpack.c.h.b16 %v203
    %v228 = vunpack.c.l.b16 %v204
    %v229 = vunpack.c.h.b16 %v204
    %v230 = vunpack.c.l.b16 %v205
    %v231 = vunpack.c.h.b16 %v205
    %v232 = vunpack.c.l.b16 %v206
    %v233 = vunpack.c.h.b16 %v206
    %v234 = vunpack.c.l.b16 %v207
    %v235 = vunpack.c.h.b16 %v207
    %v236 = vunpack.c.l.b16 %v208
    %v237 = vunpack.c.h.b16 %v208
    %v238 = vunpack.c.l.b16 %v209
    %v239 = vunpack.c.h.b16 %v209
    %v240 = vpack.c.b16 %v226, %v224
    %v241 = vpack.c.b16 %v227, %v225
    %v242 = vpack.c.b16 %v230, %v228
    %v243 = vpack.c.b16 %v231, %v229
    %v244 = vpack.c.b16 %v234, %v232
    %v245 = vpack.c.b16 %v235, %v233
    %v246 = vpack.c.b16 %v238, %v236
    %v247 = vpack.c.b16 %v239, %v237
    %v257 = vsel %vm86, %v200, 0
    %v260 = vsel %vm86, %v201, 0
    %262 = vmatpush.bf16.msra.mxu0 0
    %263 = vmatpush.bf16.msra.mxu0 0
    %264 = vmatpush.bf16.msra.mxu0 0
    %265 = vmatpush.bf16.msra.mxu0 0
    %266 = vmatpush.bf16.msra.mxu0 %v246
    %267 = vmatpush.bf16.msra.mxu0 %v244
    %268 = vmatpush.bf16.msra.mxu0 %v242
    %269 = vmatpush.bf16.msra.mxu0 %v240
    %270 = vmatmul.bf16.gmra.mxu0 %v257
    %v271 = vpop.f32.mrf.mxu0
    %v272 = vadd.f32 %v212, %v271
    %v273 = vpop.f32.mrf.mxu0
    %v274 = vadd.f32 %v212, %v273
    %275 = vmatmul.bf16.gmra.mxu0 %v260
    %v276 = vpop.f32.mrf.mxu0
    %v277 = vadd.f32 %v212, %v276
    %v278 = vpop.f32.mrf.mxu0
    %v279 = vadd.f32 %v212, %v278
    %280 = vdwg.mxu0
    %281 = vmatpush.bf16.msra.mxu0 0
    %282 = vmatpush.bf16.msra.mxu0 0
    %283 = vmatpush.bf16.msra.mxu0 0
    %284 = vmatpush.bf16.msra.mxu0 0
    %285 = vmatpush.bf16.msra.mxu0 %v247
    %286 = vmatpush.bf16.msra.mxu0 %v245
    %287 = vmatpush.bf16.msra.mxu0 %v243
    %288 = vmatpush.bf16.msra.mxu0 %v241
    %289 = vmatmul.bf16.gmra.mxu0 %v257
    %v290 = vpop.f32.mrf.mxu0
    %v291 = vadd.f32 %v213, %v290
    %v292 = vpop.f32.mrf.mxu0
    %v293 = vadd.f32 %v213, %v292
    %294 = vmatmul.bf16.gmra.mxu0 %v260
    %v295 = vpop.f32.mrf.mxu0
    %v296 = vadd.f32 %v213, %v295
    %v297 = vpop.f32.mrf.mxu0
    %v298 = vadd.f32 %v213, %v297
    %299 = vdwg.mxu0
    %304 = vrot.lane.b32.xlu0 %v272, 80
    %v305 = vpop.permute.xlu0 %304
    %306 = vrot.lane.b32.xlu0 %v274, 80
    %v307 = vpop.permute.xlu0 %306
    %308 = vrot.lane.b32.xlu0 %v277, 80
    %v309 = vpop.permute.xlu0 %308
    %310 = vrot.lane.b32.xlu0 %v279, 80
    %v311 = vpop.permute.xlu0 %310
    %320 = vrot.lane.b32.xlu0 %v272, 32
    %v321 = vpop.permute.xlu0 %320
    %322 = vrot.lane.b32.xlu0 %v291, 32
    %v323 = vpop.permute.xlu0 %322
    %324 = vrot.lane.b32.xlu0 %v274, 32
    %v325 = vpop.permute.xlu0 %324
    %326 = vrot.lane.b32.xlu0 %v293, 32
    %v327 = vpop.permute.xlu0 %326
    %328 = vrot.lane.b32.xlu0 %v277, 32
    %v329 = vpop.permute.xlu0 %328
    %330 = vrot.lane.b32.xlu0 %v296, 32
    %v331 = vpop.permute.xlu0 %330
    %332 = vrot.lane.b32.xlu0 %v279, 32
    %v333 = vpop.permute.xlu0 %332
    %334 = vrot.lane.b32.xlu0 %v298, 32
    %v335 = vpop.permute.xlu0 %334
    %vm336 = vcmask 261120
    %v337 = vsel %vm336, %v321, %v323
    %v338 = vsel %vm336, %v325, %v327
    %v339 = vsel %vm336, %v329, %v331
    %v340 = vsel %vm336, %v333, %v335
    %345 = vrot.lane.b32.xlu0 %v291, 112
    %v346 = vpop.permute.xlu0 %345
    %347 = vrot.lane.b32.xlu0 %v293, 112
    %v348 = vpop.permute.xlu0 %347
    %349 = vrot.lane.b32.xlu0 %v296, 112
    %v350 = vpop.permute.xlu0 %349
    %351 = vrot.lane.b32.xlu0 %v298, 112
    %v352 = vpop.permute.xlu0 %351
    %v357 = vpack.c.bf16 %v272, %v272
    %v358 = vpack.c.bf16 %v274, %v274
    %v359 = vpack.c.bf16 %v277, %v277
    %v360 = vpack.c.bf16 %v279, %v279
    %v361 = vpack.c.bf16 %v305, %v305
    %v362 = vpack.c.bf16 %v307, %v307
    %v363 = vpack.c.bf16 %v309, %v309
    %v364 = vpack.c.bf16 %v311, %v311
    %v365 = vpack.c.bf16 %v337, %v337
    %v366 = vpack.c.bf16 %v338, %v338
    %v367 = vpack.c.bf16 %v339, %v339
    %v368 = vpack.c.bf16 %v340, %v340
    %v369 = vpack.c.bf16 %v346, %v346
    %v370 = vpack.c.bf16 %v348, %v348
    %v371 = vpack.c.bf16 %v350, %v350
    %v372 = vpack.c.bf16 %v352, %v352
    %v375 = vunpack.c.l.b16 %v357
    %v376 = vunpack.c.l.b16 %v358
    %v377 = vpack.c.b16 %v376, %v375
    %378 = vrot.lane.b32.xlu0 %v377, 112
    %v379 = vpop.permute.xlu0 %378
    %vm380 = vcmask 130048
    %v382 = vsel %vm380, %v377, 0
    %v385 = vsel %vm380, %v379, 0
    %387 = vmatpush.bf16.xpose.msra.mxu0 0
    %388 = vmatpush.bf16.xpose.msra.mxu0 0
    %389 = vmatpush.bf16.xpose.msra.mxu0 0
    %390 = vmatpush.bf16.xpose.msra.mxu0 0
    %391 = vmatpush.bf16.xpose.msra.mxu0 0
    %392 = vmatpush.bf16.xpose.msra.mxu0 0
    %393 = vmatpush.bf16.xpose.msra.mxu0 0
    %394 = vmatpush.bf16.xpose.msra.mxu0 %v385
    %395 = vmatmul.bf16.gmra.mxu0 %v382
    %v396 = vpop.f32.mrf.mxu0
    %v397 = vadd.f32 0.0, %v396
    %v398 = vpop.f32.mrf.mxu0
    %v399 = vadd.f32 0.0, %v398
    %400 = vdwg.mxu0
    %v403 = vunpack.c.l.b16 %v359
    %v404 = vunpack.c.l.b16 %v360
    %v405 = vpack.c.b16 %v404, %v403
    %406 = vrot.lane.b32.xlu0 %v405, 112
    %v407 = vpop.permute.xlu0 %406
    %v409 = vsel %vm380, %v405, 0
    %v412 = vsel %vm380, %v407, 0
    %414 = vmatpush.bf16.xpose.msra.mxu0 0
    %415 = vmatpush.bf16.xpose.msra.mxu0 0
    %416 = vmatpush.bf16.xpose.msra.mxu0 0
    %417 = vmatpush.bf16.xpose.msra.mxu0 0
    %418 = vmatpush.bf16.xpose.msra.mxu0 0
    %419 = vmatpush.bf16.xpose.msra.mxu0 0
    %420 = vmatpush.bf16.xpose.msra.mxu0 0
    %421 = vmatpush.bf16.xpose.msra.mxu0 %v412
    %422 = vmatmul.bf16.gmra.mxu0 %v409
    %v423 = vpop.f32.mrf.mxu0
    %v424 = vadd.f32 0.0, %v423
    %v425 = vpop.f32.mrf.mxu0
    %v426 = vadd.f32 0.0, %v425
    %427 = vdwg.mxu0
    %v430 = vunpack.c.l.b16 %v361
    %v431 = vunpack.c.l.b16 %v362
    %v432 = vpack.c.b16 %v431, %v430
    %433 = vrot.lane.b32.xlu0 %v432, 112
    %v434 = vpop.permute.xlu0 %433
    %v436 = vsel %vm380, %v432, 0
    %v439 = vsel %vm380, %v434, 0
    %441 = vmatpush.bf16.xpose.msra.mxu0 0
    %442 = vmatpush.bf16.xpose.msra.mxu0 0
    %443 = vmatpush.bf16.xpose.msra.mxu0 0
    %444 = vmatpush.bf16.xpose.msra.mxu0 0
    %445 = vmatpush.bf16.xpose.msra.mxu0 0
    %446 = vmatpush.bf16.xpose.msra.mxu0 0
    %447 = vmatpush.bf16.xpose.msra.mxu0 0
    %448 = vmatpush.bf16.xpose.msra.mxu0 %v439
    %449 = vmatmul.bf16.gmra.mxu0 %v436
    %v450 = vpop.f32.mrf.mxu0
    %v451 = vadd.f32 0.0, %v450
    %v452 = vpop.f32.mrf.mxu0
    %v453 = vadd.f32 0.0, %v452
    %454 = vdwg.mxu0
    %v457 = vunpack.c.l.b16 %v363
    %v458 = vunpack.c.l.b16 %v364
    %v459 = vpack.c.b16 %v458, %v457
    %460 = vrot.lane.b32.xlu0 %v459, 112
    %v461 = vpop.permute.xlu0 %460
    %v463 = vsel %vm380, %v459, 0
    %v466 = vsel %vm380, %v461, 0
    %468 = vmatpush.bf16.xpose.msra.mxu0 0
    %469 = vmatpush.bf16.xpose.msra.mxu0 0
    %470 = vmatpush.bf16.xpose.msra.mxu0 0
    %471 = vmatpush.bf16.xpose.msra.mxu0 0
    %472 = vmatpush.bf16.xpose.msra.mxu0 0
    %473 = vmatpush.bf16.xpose.msra.mxu0 0
    %474 = vmatpush.bf16.xpose.msra.mxu0 0
    %475 = vmatpush.bf16.xpose.msra.mxu0 %v466
    %476 = vmatmul.bf16.gmra.mxu0 %v463
    %v477 = vpop.f32.mrf.mxu0
    %v478 = vadd.f32 0.0, %v477
    %v479 = vpop.f32.mrf.mxu0
    %v480 = vadd.f32 0.0, %v479
    %481 = vdwg.mxu0
    %v484 = vunpack.c.l.b16 %v365
    %v485 = vunpack.c.l.b16 %v366
    %v486 = vpack.c.b16 %v485, %v484
    %487 = vrot.lane.b32.xlu0 %v486, 112
    %v488 = vpop.permute.xlu0 %487
    %v490 = vsel %vm380, %v486, 0
    %v493 = vsel %vm380, %v488, 0
    %495 = vmatpush.bf16.xpose.msra.mxu0 0
    %496 = vmatpush.bf16.xpose.msra.mxu0 0
    %497 = vmatpush.bf16.xpose.msra.mxu0 0
    %498 = vmatpush.bf16.xpose.msra.mxu0 0
    %499 = vmatpush.bf16.xpose.msra.mxu0 0
    %500 = vmatpush.bf16.xpose.msra.mxu0 0
    %501 = vmatpush.bf16.xpose.msra.mxu0 0
    %502 = vmatpush.bf16.xpose.msra.mxu0 %v493
    %503 = vmatmul.bf16.gmra.mxu0 %v490
    %v504 = vpop.f32.mrf.mxu0
    %v505 = vadd.f32 0.0, %v504
    %v506 = vpop.f32.mrf.mxu0
    %v507 = vadd.f32 0.0, %v506
    %508 = vdwg.mxu0
    %v511 = vunpack.c.l.b16 %v367
    %v512 = vunpack.c.l.b16 %v368
    %v513 = vpack.c.b16 %v512, %v511
    %514 = vrot.lane.b32.xlu0 %v513, 112
    %v515 = vpop.permute.xlu0 %514
    %v517 = vsel %vm380, %v513, 0
    %v520 = vsel %vm380, %v515, 0
    %522 = vmatpush.bf16.xpose.msra.mxu0 0
    %523 = vmatpush.bf16.xpose.msra.mxu0 0
    %524 = vmatpush.bf16.xpose.msra.mxu0 0
    %525 = vmatpush.bf16.xpose.msra.mxu0 0
    %526 = vmatpush.bf16.xpose.msra.mxu0 0
    %527 = vmatpush.bf16.xpose.msra.mxu0 0
    %528 = vmatpush.bf16.xpose.msra.mxu0 0
    %529 = vmatpush.bf16.xpose.msra.mxu0 %v520
    %530 = vmatmul.bf16.gmra.mxu0 %v517
    %v531 = vpop.f32.mrf.mxu0
    %v532 = vadd.f32 0.0, %v531
    %v533 = vpop.f32.mrf.mxu0
    %v534 = vadd.f32 0.0, %v533
    %535 = vdwg.mxu0
    %v538 = vunpack.c.l.b16 %v369
    %v539 = vunpack.c.l.b16 %v370
    %v540 = vpack.c.b16 %v539, %v538
    %541 = vrot.lane.b32.xlu0 %v540, 112
    %v542 = vpop.permute.xlu0 %541
    %v544 = vsel %vm380, %v540, 0
    %v547 = vsel %vm380, %v542, 0
    %549 = vmatpush.bf16.xpose.msra.mxu0 0
    %550 = vmatpush.bf16.xpose.msra.mxu0 0
    %551 = vmatpush.bf16.xpose.msra.mxu0 0
    %552 = vmatpush.bf16.xpose.msra.mxu0 0
    %553 = vmatpush.bf16.xpose.msra.mxu0 0
    %554 = vmatpush.bf16.xpose.msra.mxu0 0
    %555 = vmatpush.bf16.xpose.msra.mxu0 0
    %556 = vmatpush.bf16.xpose.msra.mxu0 %v547
    %557 = vmatmul.bf16.gmra.mxu0 %v544
    %v558 = vpop.f32.mrf.mxu0
    %v559 = vadd.f32 0.0, %v558
    %v560 = vpop.f32.mrf.mxu0
    %v561 = vadd.f32 0.0, %v560
    %562 = vdwg.mxu0
    %v565 = vunpack.c.l.b16 %v371
    %v566 = vunpack.c.l.b16 %v372
    %v567 = vpack.c.b16 %v566, %v565
    %568 = vrot.lane.b32.xlu0 %v567, 112
    %v569 = vpop.permute.xlu0 %568
    %v571 = vsel %vm380, %v567, 0
    %v574 = vsel %vm380, %v569, 0
    %576 = vmatpush.bf16.xpose.msra.mxu0 0
    %577 = vmatpush.bf16.xpose.msra.mxu0 0
    %578 = vmatpush.bf16.xpose.msra.mxu0 0
    %579 = vmatpush.bf16.xpose.msra.mxu0 0
    %580 = vmatpush.bf16.xpose.msra.mxu0 0
    %581 = vmatpush.bf16.xpose.msra.mxu0 0
    %582 = vmatpush.bf16.xpose.msra.mxu0 0
    %583 = vmatpush.bf16.xpose.msra.mxu0 %v574
    %584 = vmatmul.bf16.gmra.mxu0 %v571
    %v585 = vpop.f32.mrf.mxu0
    %v586 = vadd.f32 0.0, %v585
    %v587 = vpop.f32.mrf.mxu0
    %v588 = vadd.f32 0.0, %v587
    %589 = vdwg.mxu0
    %v590 = vld [vmem:[%s2] sm:$0x1]
    %v591 = vld [vmem:[%s2 + $0x1] sm:$0x1]
    %v592 = vsub.f32 1.0, %v590
    %v593 = vsub.f32 1.0, %v591
    %v594 = vmul.f32 %v592, -1e+08
    %v595 = vmul.f32 %v593, -1e+08
    %v598 = vperm.slane %v594, 0
    %v599 = vperm.slane %v595, 0
    %v602 = vadd.f32 %v397, %v598
    %v603 = vadd.f32 %v399, %v598
    %v604 = vadd.f32 %v424, %v599
    %v605 = vadd.f32 %v426, %v599
    %v606 = vadd.f32 %v451, %v598
    %v607 = vadd.f32 %v453, %v598
    %v608 = vadd.f32 %v478, %v599
    %v609 = vadd.f32 %v480, %v599
    %v610 = vadd.f32 %v505, %v598
    %v611 = vadd.f32 %v507, %v598
    %v612 = vadd.f32 %v532, %v599
    %v613 = vadd.f32 %v534, %v599
    %v614 = vadd.f32 %v559, %v598
    %v615 = vadd.f32 %v561, %v598
    %v616 = vadd.f32 %v586, %v599
    %v617 = vadd.f32 %v588, %v599
    %v618 = vsel %vm380, %v602, -inf
    %619 = vmax.xlane.f32.xlu0 %v618
    %v620 = vpop.xlane.xlu0 %619
    %v621 = vsel %vm380, %v603, -inf
    %622 = vmax.xlane.f32.xlu0 %v621
    %v623 = vpop.xlane.xlu0 %622
    %v624 = vsel %vm380, %v604, -inf
    %625 = vmax.xlane.f32.xlu0 %v624
    %v626 = vpop.xlane.xlu0 %625
    %v627 = vsel %vm380, %v605, -inf
    %628 = vmax.xlane.f32.xlu0 %v627
    %v629 = vpop.xlane.xlu0 %628
    %v630 = vsel %vm380, %v606, -inf
    %631 = vmax.xlane.f32.xlu0 %v630
    %v632 = vpop.xlane.xlu0 %631
    %v633 = vsel %vm380, %v607, -inf
    %634 = vmax.xlane.f32.xlu0 %v633
    %v635 = vpop.xlane.xlu0 %634
    %v636 = vsel %vm380, %v608, -inf
    %637 = vmax.xlane.f32.xlu0 %v636
    %v638 = vpop.xlane.xlu0 %637
    %v639 = vsel %vm380, %v609, -inf
    %640 = vmax.xlane.f32.xlu0 %v639
    %v641 = vpop.xlane.xlu0 %640
    %v642 = vsel %vm380, %v610, -inf
    %643 = vmax.xlane.f32.xlu0 %v642
    %v644 = vpop.xlane.xlu0 %643
    %v645 = vsel %vm380, %v611, -inf
    %646 = vmax.xlane.f32.xlu0 %v645
    %v647 = vpop.xlane.xlu0 %646
    %v648 = vsel %vm380, %v612, -inf
    %649 = vmax.xlane.f32.xlu0 %v648
    %v650 = vpop.xlane.xlu0 %649
    %v651 = vsel %vm380, %v613, -inf
    %652 = vmax.xlane.f32.xlu0 %v651
    %v653 = vpop.xlane.xlu0 %652
    %v654 = vsel %vm380, %v614, -inf
    %655 = vmax.xlane.f32.xlu0 %v654
    %v656 = vpop.xlane.xlu0 %655
    %v657 = vsel %vm380, %v615, -inf
    %658 = vmax.xlane.f32.xlu0 %v657
    %v659 = vpop.xlane.xlu0 %658
    %v660 = vsel %vm380, %v616, -inf
    %661 = vmax.xlane.f32.xlu0 %v660
    %v662 = vpop.xlane.xlu0 %661
    %v663 = vsel %vm380, %v617, -inf
    %664 = vmax.xlane.f32.xlu0 %v663
    %v665 = vpop.xlane.xlu0 %664
    %v666 = vsub.f32 %v602, %v620
    %v667 = vsub.f32 %v603, %v623
    %v668 = vsub.f32 %v604, %v626
    %v669 = vsub.f32 %v605, %v629
    %v670 = vsub.f32 %v606, %v632
    %v671 = vsub.f32 %v607, %v635
    %v672 = vsub.f32 %v608, %v638
    %v673 = vsub.f32 %v609, %v641
    %v674 = vsub.f32 %v610, %v644
    %v675 = vsub.f32 %v611, %v647
    %v676 = vsub.f32 %v612, %v650
    %v677 = vsub.f32 %v613, %v653
    %v678 = vsub.f32 %v614, %v656
    %v679 = vsub.f32 %v615, %v659
    %v680 = vsub.f32 %v616, %v662
    %v681 = vsub.f32 %v617, %v665
    %v682 = vmul.f32 %v666, 1.442695
    %v683 = vpow.pop %v682
    %v684 = vmul.f32 %v667, 1.442695
    %v685 = vpow.pop %v684
    %v686 = vmul.f32 %v668, 1.442695
    %v687 = vpow.pop %v686
    %v688 = vmul.f32 %v669, 1.442695
    %v689 = vpow.pop %v688
    %v690 = vmul.f32 %v670, 1.442695
    %v691 = vpow.pop %v690
    %v692 = vmul.f32 %v671, 1.442695
    %v693 = vpow.pop %v692
    %v694 = vmul.f32 %v672, 1.442695
    %v695 = vpow.pop %v694
    %v696 = vmul.f32 %v673, 1.442695
    %v697 = vpow.pop %v696
    %v698 = vmul.f32 %v674, 1.442695
    %v699 = vpow.pop %v698
    %v700 = vmul.f32 %v675, 1.442695
    %v701 = vpow.pop %v700
    %v702 = vmul.f32 %v676, 1.442695
    %v703 = vpow.pop %v702
    %v704 = vmul.f32 %v677, 1.442695
    %v705 = vpow.pop %v704
    %v706 = vmul.f32 %v678, 1.442695
    %v707 = vpow.pop %v706
    %v708 = vmul.f32 %v679, 1.442695
    %v709 = vpow.pop %v708
    %v710 = vmul.f32 %v680, 1.442695
    %v711 = vpow.pop %v710
    %v712 = vmul.f32 %v681, 1.442695
    %v713 = vpow.pop %v712
    %v714 = vsel %vm380, %v683, 0.0
    %715 = vadd.xlane.f32.xlu0 %v714
    %v716 = vpop.xlane.xlu0 %715
    %v717 = vsel %vm380, %v685, 0.0
    %718 = vadd.xlane.f32.xlu0 %v717
    %v719 = vpop.xlane.xlu0 %718
    %v720 = vsel %vm380, %v687, 0.0
    %721 = vadd.xlane.f32.xlu0 %v720
    %v722 = vpop.xlane.xlu0 %721
    %v723 = vsel %vm380, %v689, 0.0
    %724 = vadd.xlane.f32.xlu0 %v723
    %v725 = vpop.xlane.xlu0 %724
    %v726 = vsel %vm380, %v691, 0.0
    %727 = vadd.xlane.f32.xlu0 %v726
    %v728 = vpop.xlane.xlu0 %727
    %v729 = vsel %vm380, %v693, 0.0
    %730 = vadd.xlane.f32.xlu0 %v729
    %v731 = vpop.xlane.xlu0 %730
    %v732 = vsel %vm380, %v695, 0.0
    %733 = vadd.xlane.f32.xlu0 %v732
    %v734 = vpop.xlane.xlu0 %733
    %v735 = vsel %vm380, %v697, 0.0
    %736 = vadd.xlane.f32.xlu0 %v735
    %v737 = vpop.xlane.xlu0 %736
    %v738 = vsel %vm380, %v699, 0.0
    %739 = vadd.xlane.f32.xlu0 %v738
    %v740 = vpop.xlane.xlu0 %739
    %v741 = vsel %vm380, %v701, 0.0
    %742 = vadd.xlane.f32.xlu0 %v741
    %v743 = vpop.xlane.xlu0 %742
    %v744 = vsel %vm380, %v703, 0.0
    %745 = vadd.xlane.f32.xlu0 %v744
    %v746 = vpop.xlane.xlu0 %745
    %v747 = vsel %vm380, %v705, 0.0
    %748 = vadd.xlane.f32.xlu0 %v747
    %v749 = vpop.xlane.xlu0 %748
    %v750 = vsel %vm380, %v707, 0.0
    %751 = vadd.xlane.f32.xlu0 %v750
    %v752 = vpop.xlane.xlu0 %751
    %v753 = vsel %vm380, %v709, 0.0
    %754 = vadd.xlane.f32.xlu0 %v753
    %v755 = vpop.xlane.xlu0 %754
    %v756 = vsel %vm380, %v711, 0.0
    %757 = vadd.xlane.f32.xlu0 %v756
    %v758 = vpop.xlane.xlu0 %757
    %v759 = vsel %vm380, %v713, 0.0
    %760 = vadd.xlane.f32.xlu0 %v759
    %v761 = vpop.xlane.xlu0 %760
    %v762 = vpack.c.bf16 %v683, %v683
    %v763 = vpack.c.bf16 %v685, %v685
    %v764 = vpack.c.bf16 %v687, %v687
    %v765 = vpack.c.bf16 %v689, %v689
    %v766 = vpack.c.bf16 %v691, %v691
    %v767 = vpack.c.bf16 %v693, %v693
    %v768 = vpack.c.bf16 %v695, %v695
    %v769 = vpack.c.bf16 %v697, %v697
    %v770 = vpack.c.bf16 %v699, %v699
    %v771 = vpack.c.bf16 %v701, %v701
    %v772 = vpack.c.bf16 %v703, %v703
    %v773 = vpack.c.bf16 %v705, %v705
    %v774 = vpack.c.bf16 %v707, %v707
    %v775 = vpack.c.bf16 %v709, %v709
    %v776 = vpack.c.bf16 %v711, %v711
    %v777 = vpack.c.bf16 %v713, %v713
    %v780 = vunpack.c.l.b16 %v762
    %v781 = vunpack.c.l.b16 %v763
    %v782 = vpack.c.b16 %v781, %v780
    %783 = vrot.lane.b32.xlu0 %v377, 96
    %v784 = vpop.permute.xlu0 %783
    %v787 = vsel %vm380, %v782, 0
    %789 = vmatpush.bf16.msra.mxu0 0
    %790 = vmatpush.bf16.msra.mxu0 0
    %791 = vmatpush.bf16.msra.mxu0 0
    %792 = vmatpush.bf16.msra.mxu0 0
    %793 = vmatpush.bf16.msra.mxu0 0
    %794 = vmatpush.bf16.msra.mxu0 0
    %795 = vmatpush.bf16.msra.mxu0 0
    %796 = vmatpush.bf16.msra.mxu0 %v784
    %797 = vmatmul.bf16.gmra.mxu0 %v787
    %v798 = vpop.f32.mrf.mxu0
    %v799 = vadd.f32 0.0, %v798
    %v800 = vpop.f32.mrf.mxu0
    %v801 = vadd.f32 0.0, %v800
    %802 = vdwg.mxu0
    %v805 = vunpack.c.l.b16 %v764
    %v806 = vunpack.c.l.b16 %v765
    %v807 = vpack.c.b16 %v806, %v805
    %808 = vrot.lane.b32.xlu0 %v405, 96
    %v809 = vpop.permute.xlu0 %808
    %v812 = vsel %vm380, %v807, 0
    %814 = vmatpush.bf16.msra.mxu0 0
    %815 = vmatpush.bf16.msra.mxu0 0
    %816 = vmatpush.bf16.msra.mxu0 0
    %817 = vmatpush.bf16.msra.mxu0 0
    %818 = vmatpush.bf16.msra.mxu0 0
    %819 = vmatpush.bf16.msra.mxu0 0
    %820 = vmatpush.bf16.msra.mxu0 0
    %821 = vmatpush.bf16.msra.mxu0 %v809
    %822 = vmatmul.bf16.gmra.mxu0 %v812
    %v823 = vpop.f32.mrf.mxu0
    %v824 = vadd.f32 0.0, %v823
    %v825 = vpop.f32.mrf.mxu0
    %v826 = vadd.f32 0.0, %v825
    %827 = vdwg.mxu0
    %v830 = vunpack.c.l.b16 %v766
    %v831 = vunpack.c.l.b16 %v767
    %v832 = vpack.c.b16 %v831, %v830
    %833 = vrot.lane.b32.xlu0 %v432, 96
    %v834 = vpop.permute.xlu0 %833
    %v837 = vsel %vm380, %v832, 0
    %839 = vmatpush.bf16.msra.mxu0 0
    %840 = vmatpush.bf16.msra.mxu0 0
    %841 = vmatpush.bf16.msra.mxu0 0
    %842 = vmatpush.bf16.msra.mxu0 0
    %843 = vmatpush.bf16.msra.mxu0 0
    %844 = vmatpush.bf16.msra.mxu0 0
    %845 = vmatpush.bf16.msra.mxu0 0
    %846 = vmatpush.bf16.msra.mxu0 %v834
    %847 = vmatmul.bf16.gmra.mxu0 %v837
    %v848 = vpop.f32.mrf.mxu0
    %v849 = vadd.f32 0.0, %v848
    %v850 = vpop.f32.mrf.mxu0
    %v851 = vadd.f32 0.0, %v850
    %852 = vdwg.mxu0
    %v855 = vunpack.c.l.b16 %v768
    %v856 = vunpack.c.l.b16 %v769
    %v857 = vpack.c.b16 %v856, %v855
    %858 = vrot.lane.b32.xlu0 %v459, 96
    %v859 = vpop.permute.xlu0 %858
    %v862 = vsel %vm380, %v857, 0
    %864 = vmatpush.bf16.msra.mxu0 0
    %865 = vmatpush.bf16.msra.mxu0 0
    %866 = vmatpush.bf16.msra.mxu0 0
    %867 = vmatpush.bf16.msra.mxu0 0
    %868 = vmatpush.bf16.msra.mxu0 0
    %869 = vmatpush.bf16.msra.mxu0 0
    %870 = vmatpush.bf16.msra.mxu0 0
    %871 = vmatpush.bf16.msra.mxu0 %v859
    %872 = vmatmul.bf16.gmra.mxu0 %v862
    %v873 = vpop.f32.mrf.mxu0
    %v874 = vadd.f32 0.0, %v873
    %v875 = vpop.f32.mrf.mxu0
    %v876 = vadd.f32 0.0, %v875
    %877 = vdwg.mxu0
    %v880 = vunpack.c.l.b16 %v770
    %v881 = vunpack.c.l.b16 %v771
    %v882 = vpack.c.b16 %v881, %v880
    %883 = vrot.lane.b32.xlu0 %v486, 96
    %v884 = vpop.permute.xlu0 %883
    %v887 = vsel %vm380, %v882, 0
    %889 = vmatpush.bf16.msra.mxu0 0
    %890 = vmatpush.bf16.msra.mxu0 0
    %891 = vmatpush.bf16.msra.mxu0 0
    %892 = vmatpush.bf16.msra.mxu0 0
    %893 = vmatpush.bf16.msra.mxu0 0
    %894 = vmatpush.bf16.msra.mxu0 0
    %895 = vmatpush.bf16.msra.mxu0 0
    %896 = vmatpush.bf16.msra.mxu0 %v884
    %897 = vmatmul.bf16.gmra.mxu0 %v887
    %v898 = vpop.f32.mrf.mxu0
    %v899 = vadd.f32 0.0, %v898
    %v900 = vpop.f32.mrf.mxu0
    %v901 = vadd.f32 0.0, %v900
    %902 = vdwg.mxu0
    %v905 = vunpack.c.l.b16 %v772
    %v906 = vunpack.c.l.b16 %v773
    %v907 = vpack.c.b16 %v906, %v905
    %908 = vrot.lane.b32.xlu0 %v513, 96
    %v909 = vpop.permute.xlu0 %908
    %v912 = vsel %vm380, %v907, 0
    %914 = vmatpush.bf16.msra.mxu0 0
    %915 = vmatpush.bf16.msra.mxu0 0
    %916 = vmatpush.bf16.msra.mxu0 0
    %917 = vmatpush.bf16.msra.mxu0 0
    %918 = vmatpush.bf16.msra.mxu0 0
    %919 = vmatpush.bf16.msra.mxu0 0
    %920 = vmatpush.bf16.msra.mxu0 0
    %921 = vmatpush.bf16.msra.mxu0 %v909
    %922 = vmatmul.bf16.gmra.mxu0 %v912
    %v923 = vpop.f32.mrf.mxu0
    %v924 = vadd.f32 0.0, %v923
    %v925 = vpop.f32.mrf.mxu0
    %v926 = vadd.f32 0.0, %v925
    %927 = vdwg.mxu0
    %v930 = vunpack.c.l.b16 %v774
    %v931 = vunpack.c.l.b16 %v775
    %v932 = vpack.c.b16 %v931, %v930
    %933 = vrot.lane.b32.xlu0 %v540, 96
    %v934 = vpop.permute.xlu0 %933
    %v937 = vsel %vm380, %v932, 0
    %939 = vmatpush.bf16.msra.mxu0 0
    %940 = vmatpush.bf16.msra.mxu0 0
    %941 = vmatpush.bf16.msra.mxu0 0
    %942 = vmatpush.bf16.msra.mxu0 0
    %943 = vmatpush.bf16.msra.mxu0 0
    %944 = vmatpush.bf16.msra.mxu0 0
    %945 = vmatpush.bf16.msra.mxu0 0
    %946 = vmatpush.bf16.msra.mxu0 %v934
    %947 = vmatmul.bf16.gmra.mxu0 %v937
    %v948 = vpop.f32.mrf.mxu0
    %v949 = vadd.f32 0.0, %v948
    %v950 = vpop.f32.mrf.mxu0
    %v951 = vadd.f32 0.0, %v950
    %952 = vdwg.mxu0
    %v955 = vunpack.c.l.b16 %v776
    %v956 = vunpack.c.l.b16 %v777
    %v957 = vpack.c.b16 %v956, %v955
    %958 = vrot.lane.b32.xlu0 %v567, 96
    %v959 = vpop.permute.xlu0 %958
    %v962 = vsel %vm380, %v957, 0
    %964 = vmatpush.bf16.msra.mxu0 0
    %965 = vmatpush.bf16.msra.mxu0 0
    %966 = vmatpush.bf16.msra.mxu0 0
    %967 = vmatpush.bf16.msra.mxu0 0
    %968 = vmatpush.bf16.msra.mxu0 0
    %969 = vmatpush.bf16.msra.mxu0 0
    %970 = vmatpush.bf16.msra.mxu0 0
    %971 = vmatpush.bf16.msra.mxu0 %v959
    %972 = vmatmul.bf16.gmra.mxu0 %v962
    %v973 = vpop.f32.mrf.mxu0
    %v974 = vadd.f32 0.0, %v973
    %v975 = vpop.f32.mrf.mxu0
    %v976 = vadd.f32 0.0, %v975
    %977 = vdwg.mxu0
    %v978 = vrcp.pop %v716
    %v979 = vrcp.pop %v719
    %v980 = vrcp.pop %v722
    %v981 = vrcp.pop %v725
    %v982 = vrcp.pop %v728
    %v983 = vrcp.pop %v731
    %v984 = vrcp.pop %v734
    %v985 = vrcp.pop %v737
    %v986 = vrcp.pop %v740
    %v987 = vrcp.pop %v743
    %v988 = vrcp.pop %v746
    %v989 = vrcp.pop %v749
    %v990 = vrcp.pop %v752
    %v991 = vrcp.pop %v755
    %v992 = vrcp.pop %v758
    %v993 = vrcp.pop %v761
    %v994 = vmul.f32 %v799, %v978
    %v995 = vmul.f32 %v801, %v979
    %v996 = vmul.f32 %v824, %v980
    %v997 = vmul.f32 %v826, %v981
    %v998 = vmul.f32 %v849, %v982
    %v999 = vmul.f32 %v851, %v983
    %v1000 = vmul.f32 %v874, %v984
    %v1001 = vmul.f32 %v876, %v985
    %v1002 = vmul.f32 %v899, %v986
    %v1003 = vmul.f32 %v901, %v987
    %v1004 = vmul.f32 %v924, %v988
    %v1005 = vmul.f32 %v926, %v989
    %v1006 = vmul.f32 %v949, %v990
    %v1007 = vmul.f32 %v951, %v991
    %v1008 = vmul.f32 %v974, %v992
    %v1009 = vmul.f32 %v976, %v993
    %1014 = vrot.lane.b32.xlu0 %v998, 16
    %v1015 = vpop.permute.xlu0 %1014
    %1016 = vrot.lane.b32.xlu0 %v999, 16
    %v1017 = vpop.permute.xlu0 %1016
    %1018 = vrot.lane.b32.xlu0 %v1000, 16
    %v1019 = vpop.permute.xlu0 %1018
    %1020 = vrot.lane.b32.xlu0 %v1001, 16
    %v1021 = vpop.permute.xlu0 %1020
    %1030 = vrot.lane.b32.xlu0 %v1002, 32
    %v1031 = vpop.permute.xlu0 %1030
    %1032 = vrot.lane.b32.xlu0 %v1003, 32
    %v1033 = vpop.permute.xlu0 %1032
    %1034 = vrot.lane.b32.xlu0 %v1004, 32
    %v1035 = vpop.permute.xlu0 %1034
    %1036 = vrot.lane.b32.xlu0 %v1005, 32
    %v1037 = vpop.permute.xlu0 %1036
    %1046 = vrot.lane.b32.xlu0 %v1006, 48
    %v1047 = vpop.permute.xlu0 %1046
    %1048 = vrot.lane.b32.xlu0 %v1007, 48
    %v1049 = vpop.permute.xlu0 %1048
    %1050 = vrot.lane.b32.xlu0 %v1008, 48
    %v1051 = vpop.permute.xlu0 %1050
    %1052 = vrot.lane.b32.xlu0 %v1009, 48
    %v1053 = vpop.permute.xlu0 %1052
    %v1058 = vsel %vm380, %v994, %v1015
    %v1059 = vsel %vm380, %v995, %v1017
    %v1060 = vsel %vm380, %v996, %v1019
    %v1061 = vsel %vm380, %v997, %v1021
    %v1062 = vsel %vm336, %v1058, %v1031
    %v1063 = vsel %vm336, %v1059, %v1033
    %v1064 = vsel %vm336, %v1060, %v1035
    %v1065 = vsel %vm336, %v1061, %v1037
    %vm1066 = vcmask 392192
    %v1067 = vsel %vm1066, %v1062, %v1047
    %v1068 = vsel %vm1066, %v1063, %v1049
    %v1069 = vsel %vm1066, %v1064, %v1051
    %v1070 = vsel %vm1066, %v1065, %v1053
    %v1071 = vpack.c.bf16 %v1068, %v1067
    %v1072 = vpack.c.bf16 %v1070, %v1069
    %v1073 = vld [vmem:[%s5] sm:$0xf]
    %v1074 = vld [vmem:[%s5 + $0x4] sm:$0xf]
    %v1075 = vld [vmem:[%s5 + $0x8] sm:$0xf]
    %v1076 = vld [vmem:[%s5 + $0xc] sm:$0xf]
    %v1077 = vld [vmem:[%s5 + $0x10] sm:$0xf]
    %v1078 = vld [vmem:[%s5 + $0x14] sm:$0xf]
    %v1079 = vld [vmem:[%s5 + $0x18] sm:$0xf]
    %v1080 = vld [vmem:[%s5 + $0x1c] sm:$0xf]
    %v1081 = vld [vmem:[%s6] sm:$0x1]
    %v1083 = vperm.slane %v1081, 0
    %v1093 = vunpack.c.l.b16 %v1073
    %v1094 = vunpack.c.l.b16 %v1074
    %v1095 = vunpack.c.l.b16 %v1075
    %v1096 = vunpack.c.l.b16 %v1076
    %v1097 = vunpack.c.l.b16 %v1077
    %v1098 = vunpack.c.l.b16 %v1078
    %v1099 = vunpack.c.l.b16 %v1079
    %v1100 = vunpack.c.l.b16 %v1080
    %v1101 = vpack.c.b16 %v1094, %v1093
    %v1102 = vpack.c.b16 %v1096, %v1095
    %v1103 = vpack.c.b16 %v1098, %v1097
    %v1104 = vpack.c.b16 %v1100, %v1099
    %v1110 = vsel %vm86, %v1071, 0
    %v1113 = vsel %vm86, %v1072, 0
    %1115 = vmatpush.bf16.msra.mxu0 0
    %1116 = vmatpush.bf16.msra.mxu0 0
    %1117 = vmatpush.bf16.msra.mxu0 0
    %1118 = vmatpush.bf16.msra.mxu0 0
    %1119 = vmatpush.bf16.msra.mxu0 %v1104
    %1120 = vmatpush.bf16.msra.mxu0 %v1103
    %1121 = vmatpush.bf16.msra.mxu0 %v1102
    %1122 = vmatpush.bf16.msra.mxu0 %v1101
    %1123 = vmatmul.bf16.gmra.mxu0 %v1110
    %v1124 = vpop.f32.mrf.mxu0
    %v1125 = vadd.f32 %v1083, %v1124
    %v1126 = vpop.f32.mrf.mxu0
    %v1127 = vadd.f32 %v1083, %v1126
    %1128 = vmatmul.bf16.gmra.mxu0 %v1113
    %v1129 = vpop.f32.mrf.mxu0
    %v1130 = vadd.f32 %v1083, %v1129
    %v1131 = vpop.f32.mrf.mxu0
    %v1132 = vadd.f32 %v1083, %v1131
    %1133 = vdwg.mxu0
    %v1134 = vadd.f32 %v52, %v1125
    %v1135 = vadd.f32 %v53, %v1127
    %v1136 = vadd.f32 %v54, %v1130
    %v1137 = vadd.f32 %v55, %v1132
    %v1138 = vmul.f32 %v1134, %v63
    %v1139 = vmul.f32 %v1135, %v68
    %v1140 = vmul.f32 %v1136, %v73
    %v1141 = vmul.f32 %v1137, %v78
    %v1142 = vld [vmem:[%s9] sm:$0x1]
    %v1143 = vld [vmem:[%s10] sm:$0x1]
    %v1144 = vsel %vm86, %v1138, 0.0
    %1145 = vadd.xlane.f32.xlu0 %v1144
    %v1146 = vpop.xlane.xlu0 %1145
    %v1147 = vsel %vm86, %v1139, 0.0
    %1148 = vadd.xlane.f32.xlu0 %v1147
    %v1149 = vpop.xlane.xlu0 %1148
    %v1150 = vsel %vm86, %v1140, 0.0
    %1151 = vadd.xlane.f32.xlu0 %v1150
    %v1152 = vpop.xlane.xlu0 %1151
    %v1153 = vsel %vm86, %v1141, 0.0
    %1154 = vadd.xlane.f32.xlu0 %v1153
    %v1155 = vpop.xlane.xlu0 %1154
    %v1156 = vmul.f32 %v1146, %v105
    %v1157 = vmul.f32 %v1149, %v105
    %v1158 = vmul.f32 %v1152, %v105
    %v1159 = vmul.f32 %v1155, %v105
    %v1160 = vsub.f32 %v1138, %v1156
    %v1161 = vsub.f32 %v1139, %v1157
    %v1162 = vsub.f32 %v1140, %v1158
    %v1163 = vsub.f32 %v1141, %v1159
    %v1164 = vmul.f32 %v1160, %v1160
    %v1165 = vmul.f32 %v1161, %v1161
    %v1166 = vmul.f32 %v1162, %v1162
    %v1167 = vmul.f32 %v1163, %v1163
    %v1168 = vsel %vm86, %v1164, 0.0
    %1169 = vadd.xlane.f32.xlu0 %v1168
    %v1170 = vpop.xlane.xlu0 %1169
    %v1171 = vsel %vm86, %v1165, 0.0
    %1172 = vadd.xlane.f32.xlu0 %v1171
    %v1173 = vpop.xlane.xlu0 %1172
    %v1174 = vsel %vm86, %v1166, 0.0
    %1175 = vadd.xlane.f32.xlu0 %v1174
    %v1176 = vpop.xlane.xlu0 %1175
    %v1177 = vsel %vm86, %v1167, 0.0
    %1178 = vadd.xlane.f32.xlu0 %v1177
    %v1179 = vpop.xlane.xlu0 %1178
    %v1180 = vmul.f32 %v1170, %v105
    %v1181 = vmul.f32 %v1173, %v105
    %v1182 = vmul.f32 %v1176, %v105
    %v1183 = vmul.f32 %v1179, %v105
    %v1184 = vadd.f32 %v1180, 1e-06
    %v1185 = vadd.f32 %v1181, 1e-06
    %v1186 = vadd.f32 %v1182, 1e-06
    %v1187 = vadd.f32 %v1183, 1e-06
    %v1188 = vrsqrt.pop %v1184
    %v1189 = vmul.f32 %v1188, %v1184
    %v1190 = vmul.f32 %v1189, %v1188
    %v1191 = vmul.f32 0.5, %v1190
    %v1192 = vsub.f32 1.5, %v1191
    %v1193 = vmul.f32 %v1188, %v1192
    %vm1194 = vweird.f32 %v1184
    %vm1195 = vweird.f32 %v1188
    %vm1196 = vmor %vm1194, %vm1195
    %v1197 = vsel %vm1196, %v1188, %v1193
    %v1198 = vrsqrt.pop %v1185
    %v1199 = vmul.f32 %v1198, %v1185
    %v1200 = vmul.f32 %v1199, %v1198
    %v1201 = vmul.f32 0.5, %v1200
    %v1202 = vsub.f32 1.5, %v1201
    %v1203 = vmul.f32 %v1198, %v1202
    %vm1204 = vweird.f32 %v1185
    %vm1205 = vweird.f32 %v1198
    %vm1206 = vmor %vm1204, %vm1205
    %v1207 = vsel %vm1206, %v1198, %v1203
    %v1208 = vrsqrt.pop %v1186
    %v1209 = vmul.f32 %v1208, %v1186
    %v1210 = vmul.f32 %v1209, %v1208
    %v1211 = vmul.f32 0.5, %v1210
    %v1212 = vsub.f32 1.5, %v1211
    %v1213 = vmul.f32 %v1208, %v1212
    %vm1214 = vweird.f32 %v1186
    %vm1215 = vweird.f32 %v1208
    %vm1216 = vmor %vm1214, %vm1215
    %v1217 = vsel %vm1216, %v1208, %v1213
    %v1218 = vrsqrt.pop %v1187
    %v1219 = vmul.f32 %v1218, %v1187
    %v1220 = vmul.f32 %v1219, %v1218
    %v1221 = vmul.f32 0.5, %v1220
    %v1222 = vsub.f32 1.5, %v1221
    %v1223 = vmul.f32 %v1218, %v1222
    %vm1224 = vweird.f32 %v1187
    %vm1225 = vweird.f32 %v1218
    %vm1226 = vmor %vm1224, %vm1225
    %v1227 = vsel %vm1226, %v1218, %v1223
    %v1228 = vmul.f32 %v1160, %v1197
    %v1229 = vmul.f32 %v1161, %v1207
    %v1230 = vmul.f32 %v1162, %v1217
    %v1231 = vmul.f32 %v1163, %v1227
    %v1233 = vperm.slane %v1142, 0
    %v1235 = vmul.f32 %v1228, %v1233
    %v1236 = vmul.f32 %v1229, %v1233
    %v1237 = vmul.f32 %v1230, %v1233
    %v1238 = vmul.f32 %v1231, %v1233
    %v1240 = vperm.slane %v1143, 0
    %v1242 = vadd.f32 %v1235, %v1240
    %v1243 = vadd.f32 %v1236, %v1240
    %v1244 = vadd.f32 %v1237, %v1240
    %v1245 = vadd.f32 %v1238, %v1240
    %v1246 = vmul.f32 %v1242, %v63
    %v1247 = vmul.f32 %v1243, %v68
    %v1248 = vmul.f32 %v1244, %v73
    %v1249 = vmul.f32 %v1245, %v78
    %v1250 = vpack.c.bf16 %v1247, %v1246
    %v1251 = vpack.c.bf16 %v1249, %v1248
    %v1252 = vld [vmem:[%s11] sm:$0xff]
    %v1253 = vld [vmem:[%s11 + $0x8] sm:$0xff]
    %v1254 = vld [vmem:[%s11 + $0x10] sm:$0xff]
    %v1255 = vld [vmem:[%s11 + $0x18] sm:$0xff]
    %v1256 = vld [vmem:[%s11 + $0x20] sm:$0xff]
    %v1257 = vld [vmem:[%s11 + $0x28] sm:$0xff]
    %v1258 = vld [vmem:[%s11 + $0x30] sm:$0xff]
    %v1259 = vld [vmem:[%s11 + $0x38] sm:$0xff]
    %v1260 = vld [vmem:[%s12] sm:$0x3]
    %v1262 = vperm.slane %v1260, 0
    %v1263 = vperm.slane %v1260, 1
    %v1274 = vunpack.c.l.b16 %v1252
    %v1275 = vunpack.c.h.b16 %v1252
    %v1276 = vunpack.c.l.b16 %v1253
    %v1277 = vunpack.c.h.b16 %v1253
    %v1278 = vunpack.c.l.b16 %v1254
    %v1279 = vunpack.c.h.b16 %v1254
    %v1280 = vunpack.c.l.b16 %v1255
    %v1281 = vunpack.c.h.b16 %v1255
    %v1282 = vunpack.c.l.b16 %v1256
    %v1283 = vunpack.c.h.b16 %v1256
    %v1284 = vunpack.c.l.b16 %v1257
    %v1285 = vunpack.c.h.b16 %v1257
    %v1286 = vunpack.c.l.b16 %v1258
    %v1287 = vunpack.c.h.b16 %v1258
    %v1288 = vunpack.c.l.b16 %v1259
    %v1289 = vunpack.c.h.b16 %v1259
    %v1290 = vpack.c.b16 %v1276, %v1274
    %v1291 = vpack.c.b16 %v1277, %v1275
    %v1292 = vpack.c.b16 %v1280, %v1278
    %v1293 = vpack.c.b16 %v1281, %v1279
    %v1294 = vpack.c.b16 %v1284, %v1282
    %v1295 = vpack.c.b16 %v1285, %v1283
    %v1296 = vpack.c.b16 %v1288, %v1286
    %v1297 = vpack.c.b16 %v1289, %v1287
    %v1307 = vsel %vm86, %v1250, 0
    %v1310 = vsel %vm86, %v1251, 0
    %1312 = vmatpush.bf16.msra.mxu0 0
    %1313 = vmatpush.bf16.msra.mxu0 0
    %1314 = vmatpush.bf16.msra.mxu0 0
    %1315 = vmatpush.bf16.msra.mxu0 0
    %1316 = vmatpush.bf16.msra.mxu0 %v1296
    %1317 = vmatpush.bf16.msra.mxu0 %v1294
    %1318 = vmatpush.bf16.msra.mxu0 %v1292
    %1319 = vmatpush.bf16.msra.mxu0 %v1290
    %1320 = vmatmul.bf16.gmra.mxu0 %v1307
    %v1321 = vpop.f32.mrf.mxu0
    %v1322 = vadd.f32 %v1262, %v1321
    %v1323 = vpop.f32.mrf.mxu0
    %v1324 = vadd.f32 %v1262, %v1323
    %1325 = vmatmul.bf16.gmra.mxu0 %v1310
    %v1326 = vpop.f32.mrf.mxu0
    %v1327 = vadd.f32 %v1262, %v1326
    %v1328 = vpop.f32.mrf.mxu0
    %v1329 = vadd.f32 %v1262, %v1328
    %1330 = vdwg.mxu0
    %1331 = vmatpush.bf16.msra.mxu0 0
    %1332 = vmatpush.bf16.msra.mxu0 0
    %1333 = vmatpush.bf16.msra.mxu0 0
    %1334 = vmatpush.bf16.msra.mxu0 0
    %1335 = vmatpush.bf16.msra.mxu0 %v1297
    %1336 = vmatpush.bf16.msra.mxu0 %v1295
    %1337 = vmatpush.bf16.msra.mxu0 %v1293
    %1338 = vmatpush.bf16.msra.mxu0 %v1291
    %1339 = vmatmul.bf16.gmra.mxu0 %v1307
    %v1340 = vpop.f32.mrf.mxu0
    %v1341 = vadd.f32 %v1263, %v1340
    %v1342 = vpop.f32.mrf.mxu0
    %v1343 = vadd.f32 %v1263, %v1342
    %1344 = vmatmul.bf16.gmra.mxu0 %v1310
    %v1345 = vpop.f32.mrf.mxu0
    %v1346 = vadd.f32 %v1263, %v1345
    %v1347 = vpop.f32.mrf.mxu0
    %v1348 = vadd.f32 %v1263, %v1347
    %1349 = vdwg.mxu0
    %v1350 = vmul.f32 %v1322, 0.5
    %v1351 = vmul.f32 %v1341, 0.5
    %v1352 = vmul.f32 %v1324, 0.5
    %v1353 = vmul.f32 %v1343, 0.5
    %v1354 = vmul.f32 %v1327, 0.5
    %v1355 = vmul.f32 %v1346, 0.5
    %v1356 = vmul.f32 %v1329, 0.5
    %v1357 = vmul.f32 %v1348, 0.5
    %v1358 = vmul.f32 %v1322, 0.70710677
    %v1359 = vmul.f32 %v1341, 0.70710677
    %v1360 = vmul.f32 %v1324, 0.70710677
    %v1361 = vmul.f32 %v1343, 0.70710677
    %v1362 = vmul.f32 %v1327, 0.70710677
    %v1363 = vmul.f32 %v1346, 0.70710677
    %v1364 = vmul.f32 %v1329, 0.70710677
    %v1365 = vmul.f32 %v1348, 0.70710677
    %v1366 = vmul.f32 %v1358, %v1358
    %v1367 = vmin.f32 16.0, %v1366
    %v1368 = vmul.f32 %v1367, 2.1237322e-06
    %v1369 = vadd.f32 %v1368, 0.00028619796
    %v1370 = vmul.f32 %v1367, %v1369
    %v1371 = vadd.f32 %v1370, 0.0036580483
    %v1372 = vmul.f32 %v1367, %v1371
    %v1373 = vadd.f32 %v1372, 0.05243302
    %v1374 = vmul.f32 %v1367, %v1373
    %v1375 = vadd.f32 %v1374, 0.18741608
    %v1376 = vmul.f32 %v1367, %v1375
    %v1377 = vadd.f32 %v1376, 1.1283791
    %v1378 = vmul.f32 %v1358, %v1377
    %v1379 = vmul.f32 %v1367, 3.8918573e-05
    %v1380 = vadd.f32 %v1379, 0.001143296
    %v1381 = vmul.f32 %v1367, %v1380
    %v1382 = vadd.f32 %v1381, 0.014752088
    %v1383 = vmul.f32 %v1367, %v1382
    %v1384 = vadd.f32 %v1383, 0.112945676
    %v1385 = vmul.f32 %v1367, %v1384
    %v1386 = vadd.f32 %v1385, 0.4994258
    %v1387 = vmul.f32 %v1367, %v1386
    %v1388 = vadd.f32 %v1387, 1.0
    %v1389 = vrcp.pop %v1388
    %v1390 = vmul.f32 %v1388, %v1389
    %v1391 = vsub.f32 1.0, %v1390
    %v1392 = vmul.f32 %v1389, %v1391
    %v1393 = vadd.f32 %v1389, %v1392
    %vm1394 = vweird.f32 %v1388
    %vm1395 = vweird.f32 %v1389
    %vm1396 = vmor %vm1394, %vm1395
    %v1397 = vsel %vm1396, %v1389, %v1393
    %v1398 = vand.u32 2147483647, %v1388
    %vm1399 = vcmp.eq.f32.partialorder %v1398, 8.507059e+37
    %v1400 = vand.u32 %v1388, 2147483648
    %v1401 = vor.u32 1.1754944e-38, %v1400
    %v1402 = vsel %vm1399, %v1401, %v1397
    %v1403 = vmul.f32 %v1378, %v1402
    %v1404 = vmin.f32 %v1403, 1.0
    %v1405 = vmax.f32 %v1404, -1.0
    %v1406 = vmul.f32 %v1359, %v1359
    %v1407 = vmin.f32 16.0, %v1406
    %v1408 = vmul.f32 %v1407, 2.1237322e-06
    %v1409 = vadd.f32 %v1408, 0.00028619796
    %v1410 = vmul.f32 %v1407, %v1409
    %v1411 = vadd.f32 %v1410, 0.0036580483
    %v1412 = vmul.f32 %v1407, %v1411
    %v1413 = vadd.f32 %v1412, 0.05243302
    %v1414 = vmul.f32 %v1407, %v1413
    %v1415 = vadd.f32 %v1414, 0.18741608
    %v1416 = vmul.f32 %v1407, %v1415
    %v1417 = vadd.f32 %v1416, 1.1283791
    %v1418 = vmul.f32 %v1359, %v1417
    %v1419 = vmul.f32 %v1407, 3.8918573e-05
    %v1420 = vadd.f32 %v1419, 0.001143296
    %v1421 = vmul.f32 %v1407, %v1420
    %v1422 = vadd.f32 %v1421, 0.014752088
    %v1423 = vmul.f32 %v1407, %v1422
    %v1424 = vadd.f32 %v1423, 0.112945676
    %v1425 = vmul.f32 %v1407, %v1424
    %v1426 = vadd.f32 %v1425, 0.4994258
    %v1427 = vmul.f32 %v1407, %v1426
    %v1428 = vadd.f32 %v1427, 1.0
    %v1429 = vrcp.pop %v1428
    %v1430 = vmul.f32 %v1428, %v1429
    %v1431 = vsub.f32 1.0, %v1430
    %v1432 = vmul.f32 %v1429, %v1431
    %v1433 = vadd.f32 %v1429, %v1432
    %vm1434 = vweird.f32 %v1428
    %vm1435 = vweird.f32 %v1429
    %vm1436 = vmor %vm1434, %vm1435
    %v1437 = vsel %vm1436, %v1429, %v1433
    %v1438 = vand.u32 2147483647, %v1428
    %vm1439 = vcmp.eq.f32.partialorder %v1438, 8.507059e+37
    %v1440 = vand.u32 %v1428, 2147483648
    %v1441 = vor.u32 1.1754944e-38, %v1440
    %v1442 = vsel %vm1439, %v1441, %v1437
    %v1443 = vmul.f32 %v1418, %v1442
    %v1444 = vmin.f32 %v1443, 1.0
    %v1445 = vmax.f32 %v1444, -1.0
    %v1446 = vmul.f32 %v1360, %v1360
    %v1447 = vmin.f32 16.0, %v1446
    %v1448 = vmul.f32 %v1447, 2.1237322e-06
    %v1449 = vadd.f32 %v1448, 0.00028619796
    %v1450 = vmul.f32 %v1447, %v1449
    %v1451 = vadd.f32 %v1450, 0.0036580483
    %v1452 = vmul.f32 %v1447, %v1451
    %v1453 = vadd.f32 %v1452, 0.05243302
    %v1454 = vmul.f32 %v1447, %v1453
    %v1455 = vadd.f32 %v1454, 0.18741608
    %v1456 = vmul.f32 %v1447, %v1455
    %v1457 = vadd.f32 %v1456, 1.1283791
    %v1458 = vmul.f32 %v1360, %v1457
    %v1459 = vmul.f32 %v1447, 3.8918573e-05
    %v1460 = vadd.f32 %v1459, 0.001143296
    %v1461 = vmul.f32 %v1447, %v1460
    %v1462 = vadd.f32 %v1461, 0.014752088
    %v1463 = vmul.f32 %v1447, %v1462
    %v1464 = vadd.f32 %v1463, 0.112945676
    %v1465 = vmul.f32 %v1447, %v1464
    %v1466 = vadd.f32 %v1465, 0.4994258
    %v1467 = vmul.f32 %v1447, %v1466
    %v1468 = vadd.f32 %v1467, 1.0
    %v1469 = vrcp.pop %v1468
    %v1470 = vmul.f32 %v1468, %v1469
    %v1471 = vsub.f32 1.0, %v1470
    %v1472 = vmul.f32 %v1469, %v1471
    %v1473 = vadd.f32 %v1469, %v1472
    %vm1474 = vweird.f32 %v1468
    %vm1475 = vweird.f32 %v1469
    %vm1476 = vmor %vm1474, %vm1475
    %v1477 = vsel %vm1476, %v1469, %v1473
    %v1478 = vand.u32 2147483647, %v1468
    %vm1479 = vcmp.eq.f32.partialorder %v1478, 8.507059e+37
    %v1480 = vand.u32 %v1468, 2147483648
    %v1481 = vor.u32 1.1754944e-38, %v1480
    %v1482 = vsel %vm1479, %v1481, %v1477
    %v1483 = vmul.f32 %v1458, %v1482
    %v1484 = vmin.f32 %v1483, 1.0
    %v1485 = vmax.f32 %v1484, -1.0
    %v1486 = vmul.f32 %v1361, %v1361
    %v1487 = vmin.f32 16.0, %v1486
    %v1488 = vmul.f32 %v1487, 2.1237322e-06
    %v1489 = vadd.f32 %v1488, 0.00028619796
    %v1490 = vmul.f32 %v1487, %v1489
    %v1491 = vadd.f32 %v1490, 0.0036580483
    %v1492 = vmul.f32 %v1487, %v1491
    %v1493 = vadd.f32 %v1492, 0.05243302
    %v1494 = vmul.f32 %v1487, %v1493
    %v1495 = vadd.f32 %v1494, 0.18741608
    %v1496 = vmul.f32 %v1487, %v1495
    %v1497 = vadd.f32 %v1496, 1.1283791
    %v1498 = vmul.f32 %v1361, %v1497
    %v1499 = vmul.f32 %v1487, 3.8918573e-05
    %v1500 = vadd.f32 %v1499, 0.001143296
    %v1501 = vmul.f32 %v1487, %v1500
    %v1502 = vadd.f32 %v1501, 0.014752088
    %v1503 = vmul.f32 %v1487, %v1502
    %v1504 = vadd.f32 %v1503, 0.112945676
    %v1505 = vmul.f32 %v1487, %v1504
    %v1506 = vadd.f32 %v1505, 0.4994258
    %v1507 = vmul.f32 %v1487, %v1506
    %v1508 = vadd.f32 %v1507, 1.0
    %v1509 = vrcp.pop %v1508
    %v1510 = vmul.f32 %v1508, %v1509
    %v1511 = vsub.f32 1.0, %v1510
    %v1512 = vmul.f32 %v1509, %v1511
    %v1513 = vadd.f32 %v1509, %v1512
    %vm1514 = vweird.f32 %v1508
    %vm1515 = vweird.f32 %v1509
    %vm1516 = vmor %vm1514, %vm1515
    %v1517 = vsel %vm1516, %v1509, %v1513
    %v1518 = vand.u32 2147483647, %v1508
    %vm1519 = vcmp.eq.f32.partialorder %v1518, 8.507059e+37
    %v1520 = vand.u32 %v1508, 2147483648
    %v1521 = vor.u32 1.1754944e-38, %v1520
    %v1522 = vsel %vm1519, %v1521, %v1517
    %v1523 = vmul.f32 %v1498, %v1522
    %v1524 = vmin.f32 %v1523, 1.0
    %v1525 = vmax.f32 %v1524, -1.0
    %v1526 = vmul.f32 %v1362, %v1362
    %v1527 = vmin.f32 16.0, %v1526
    %v1528 = vmul.f32 %v1527, 2.1237322e-06
    %v1529 = vadd.f32 %v1528, 0.00028619796
    %v1530 = vmul.f32 %v1527, %v1529
    %v1531 = vadd.f32 %v1530, 0.0036580483
    %v1532 = vmul.f32 %v1527, %v1531
    %v1533 = vadd.f32 %v1532, 0.05243302
    %v1534 = vmul.f32 %v1527, %v1533
    %v1535 = vadd.f32 %v1534, 0.18741608
    %v1536 = vmul.f32 %v1527, %v1535
    %v1537 = vadd.f32 %v1536, 1.1283791
    %v1538 = vmul.f32 %v1362, %v1537
    %v1539 = vmul.f32 %v1527, 3.8918573e-05
    %v1540 = vadd.f32 %v1539, 0.001143296
    %v1541 = vmul.f32 %v1527, %v1540
    %v1542 = vadd.f32 %v1541, 0.014752088
    %v1543 = vmul.f32 %v1527, %v1542
    %v1544 = vadd.f32 %v1543, 0.112945676
    %v1545 = vmul.f32 %v1527, %v1544
    %v1546 = vadd.f32 %v1545, 0.4994258
    %v1547 = vmul.f32 %v1527, %v1546
    %v1548 = vadd.f32 %v1547, 1.0
    %v1549 = vrcp.pop %v1548
    %v1550 = vmul.f32 %v1548, %v1549
    %v1551 = vsub.f32 1.0, %v1550
    %v1552 = vmul.f32 %v1549, %v1551
    %v1553 = vadd.f32 %v1549, %v1552
    %vm1554 = vweird.f32 %v1548
    %vm1555 = vweird.f32 %v1549
    %vm1556 = vmor %vm1554, %vm1555
    %v1557 = vsel %vm1556, %v1549, %v1553
    %v1558 = vand.u32 2147483647, %v1548
    %vm1559 = vcmp.eq.f32.partialorder %v1558, 8.507059e+37
    %v1560 = vand.u32 %v1548, 2147483648
    %v1561 = vor.u32 1.1754944e-38, %v1560
    %v1562 = vsel %vm1559, %v1561, %v1557
    %v1563 = vmul.f32 %v1538, %v1562
    %v1564 = vmin.f32 %v1563, 1.0
    %v1565 = vmax.f32 %v1564, -1.0
    %v1566 = vmul.f32 %v1363, %v1363
    %v1567 = vmin.f32 16.0, %v1566
    %v1568 = vmul.f32 %v1567, 2.1237322e-06
    %v1569 = vadd.f32 %v1568, 0.00028619796
    %v1570 = vmul.f32 %v1567, %v1569
    %v1571 = vadd.f32 %v1570, 0.0036580483
    %v1572 = vmul.f32 %v1567, %v1571
    %v1573 = vadd.f32 %v1572, 0.05243302
    %v1574 = vmul.f32 %v1567, %v1573
    %v1575 = vadd.f32 %v1574, 0.18741608
    %v1576 = vmul.f32 %v1567, %v1575
    %v1577 = vadd.f32 %v1576, 1.1283791
    %v1578 = vmul.f32 %v1363, %v1577
    %v1579 = vmul.f32 %v1567, 3.8918573e-05
    %v1580 = vadd.f32 %v1579, 0.001143296
    %v1581 = vmul.f32 %v1567, %v1580
    %v1582 = vadd.f32 %v1581, 0.014752088
    %v1583 = vmul.f32 %v1567, %v1582
    %v1584 = vadd.f32 %v1583, 0.112945676
    %v1585 = vmul.f32 %v1567, %v1584
    %v1586 = vadd.f32 %v1585, 0.4994258
    %v1587 = vmul.f32 %v1567, %v1586
    %v1588 = vadd.f32 %v1587, 1.0
    %v1589 = vrcp.pop %v1588
    %v1590 = vmul.f32 %v1588, %v1589
    %v1591 = vsub.f32 1.0, %v1590
    %v1592 = vmul.f32 %v1589, %v1591
    %v1593 = vadd.f32 %v1589, %v1592
    %vm1594 = vweird.f32 %v1588
    %vm1595 = vweird.f32 %v1589
    %vm1596 = vmor %vm1594, %vm1595
    %v1597 = vsel %vm1596, %v1589, %v1593
    %v1598 = vand.u32 2147483647, %v1588
    %vm1599 = vcmp.eq.f32.partialorder %v1598, 8.507059e+37
    %v1600 = vand.u32 %v1588, 2147483648
    %v1601 = vor.u32 1.1754944e-38, %v1600
    %v1602 = vsel %vm1599, %v1601, %v1597
    %v1603 = vmul.f32 %v1578, %v1602
    %v1604 = vmin.f32 %v1603, 1.0
    %v1605 = vmax.f32 %v1604, -1.0
    %v1606 = vmul.f32 %v1364, %v1364
    %v1607 = vmin.f32 16.0, %v1606
    %v1608 = vmul.f32 %v1607, 2.1237322e-06
    %v1609 = vadd.f32 %v1608, 0.00028619796
    %v1610 = vmul.f32 %v1607, %v1609
    %v1611 = vadd.f32 %v1610, 0.0036580483
    %v1612 = vmul.f32 %v1607, %v1611
    %v1613 = vadd.f32 %v1612, 0.05243302
    %v1614 = vmul.f32 %v1607, %v1613
    %v1615 = vadd.f32 %v1614, 0.18741608
    %v1616 = vmul.f32 %v1607, %v1615
    %v1617 = vadd.f32 %v1616, 1.1283791
    %v1618 = vmul.f32 %v1364, %v1617
    %v1619 = vmul.f32 %v1607, 3.8918573e-05
    %v1620 = vadd.f32 %v1619, 0.001143296
    %v1621 = vmul.f32 %v1607, %v1620
    %v1622 = vadd.f32 %v1621, 0.014752088
    %v1623 = vmul.f32 %v1607, %v1622
    %v1624 = vadd.f32 %v1623, 0.112945676
    %v1625 = vmul.f32 %v1607, %v1624
    %v1626 = vadd.f32 %v1625, 0.4994258
    %v1627 = vmul.f32 %v1607, %v1626
    %v1628 = vadd.f32 %v1627, 1.0
    %v1629 = vrcp.pop %v1628
    %v1630 = vmul.f32 %v1628, %v1629
    %v1631 = vsub.f32 1.0, %v1630
    %v1632 = vmul.f32 %v1629, %v1631
    %v1633 = vadd.f32 %v1629, %v1632
    %vm1634 = vweird.f32 %v1628
    %vm1635 = vweird.f32 %v1629
    %vm1636 = vmor %vm1634, %vm1635
    %v1637 = vsel %vm1636, %v1629, %v1633
    %v1638 = vand.u32 2147483647, %v1628
    %vm1639 = vcmp.eq.f32.partialorder %v1638, 8.507059e+37
    %v1640 = vand.u32 %v1628, 2147483648
    %v1641 = vor.u32 1.1754944e-38, %v1640
    %v1642 = vsel %vm1639, %v1641, %v1637
    %v1643 = vmul.f32 %v1618, %v1642
    %v1644 = vmin.f32 %v1643, 1.0
    %v1645 = vmax.f32 %v1644, -1.0
    %v1646 = vmul.f32 %v1365, %v1365
    %v1647 = vmin.f32 16.0, %v1646
    %v1648 = vmul.f32 %v1647, 2.1237322e-06
    %v1649 = vadd.f32 %v1648, 0.00028619796
    %v1650 = vmul.f32 %v1647, %v1649
    %v1651 = vadd.f32 %v1650, 0.0036580483
    %v1652 = vmul.f32 %v1647, %v1651
    %v1653 = vadd.f32 %v1652, 0.05243302
    %v1654 = vmul.f32 %v1647, %v1653
    %v1655 = vadd.f32 %v1654, 0.18741608
    %v1656 = vmul.f32 %v1647, %v1655
    %v1657 = vadd.f32 %v1656, 1.1283791
    %v1658 = vmul.f32 %v1365, %v1657
    %v1659 = vmul.f32 %v1647, 3.8918573e-05
    %v1660 = vadd.f32 %v1659, 0.001143296
    %v1661 = vmul.f32 %v1647, %v1660
    %v1662 = vadd.f32 %v1661, 0.014752088
    %v1663 = vmul.f32 %v1647, %v1662
    %v1664 = vadd.f32 %v1663, 0.112945676
    %v1665 = vmul.f32 %v1647, %v1664
    %v1666 = vadd.f32 %v1665, 0.4994258
    %v1667 = vmul.f32 %v1647, %v1666
    %v1668 = vadd.f32 %v1667, 1.0
    %v1669 = vrcp.pop %v1668
    %v1670 = vmul.f32 %v1668, %v1669
    %v1671 = vsub.f32 1.0, %v1670
    %v1672 = vmul.f32 %v1669, %v1671
    %v1673 = vadd.f32 %v1669, %v1672
    %vm1674 = vweird.f32 %v1668
    %vm1675 = vweird.f32 %v1669
    %vm1676 = vmor %vm1674, %vm1675
    %v1677 = vsel %vm1676, %v1669, %v1673
    %v1678 = vand.u32 2147483647, %v1668
    %vm1679 = vcmp.eq.f32.partialorder %v1678, 8.507059e+37
    %v1680 = vand.u32 %v1668, 2147483648
    %v1681 = vor.u32 1.1754944e-38, %v1680
    %v1682 = vsel %vm1679, %v1681, %v1677
    %v1683 = vmul.f32 %v1658, %v1682
    %v1684 = vmin.f32 %v1683, 1.0
    %v1685 = vmax.f32 %v1684, -1.0
    %v1686 = vadd.f32 %v1405, 1.0
    %v1687 = vadd.f32 %v1445, 1.0
    %v1688 = vadd.f32 %v1485, 1.0
    %v1689 = vadd.f32 %v1525, 1.0
    %v1690 = vadd.f32 %v1565, 1.0
    %v1691 = vadd.f32 %v1605, 1.0
    %v1692 = vadd.f32 %v1645, 1.0
    %v1693 = vadd.f32 %v1685, 1.0
    %v1694 = vmul.f32 %v1350, %v1686
    %v1695 = vmul.f32 %v1351, %v1687
    %v1696 = vmul.f32 %v1352, %v1688
    %v1697 = vmul.f32 %v1353, %v1689
    %v1698 = vmul.f32 %v1354, %v1690
    %v1699 = vmul.f32 %v1355, %v1691
    %v1700 = vmul.f32 %v1356, %v1692
    %v1701 = vmul.f32 %v1357, %v1693
    %v1702 = vpack.c.bf16 %v1696, %v1694
    %v1703 = vpack.c.bf16 %v1697, %v1695
    %v1704 = vpack.c.bf16 %v1700, %v1698
    %v1705 = vpack.c.bf16 %v1701, %v1699
    %v1706 = vld [vmem:[%s13] sm:$0xf]
    %v1707 = vld [vmem:[%s13 + $0x4] sm:$0xf]
    %v1708 = vld [vmem:[%s13 + $0x8] sm:$0xf]
    %v1709 = vld [vmem:[%s13 + $0xc] sm:$0xf]
    %v1710 = vld [vmem:[%s13 + $0x10] sm:$0xf]
    %v1711 = vld [vmem:[%s13 + $0x14] sm:$0xf]
    %v1712 = vld [vmem:[%s13 + $0x18] sm:$0xf]
    %v1713 = vld [vmem:[%s13 + $0x1c] sm:$0xf]
    %v1714 = vld [vmem:[%s13 + $0x20] sm:$0xf]
    %v1715 = vld [vmem:[%s13 + $0x24] sm:$0xf]
    %v1716 = vld [vmem:[%s13 + $0x28] sm:$0xf]
    %v1717 = vld [vmem:[%s13 + $0x2c] sm:$0xf]
    %v1718 = vld [vmem:[%s13 + $0x30] sm:$0xf]
    %v1719 = vld [vmem:[%s13 + $0x34] sm:$0xf]
    %v1720 = vld [vmem:[%s13 + $0x38] sm:$0xf]
    %v1721 = vld [vmem:[%s13 + $0x3c] sm:$0xf]
    %v1722 = vld [vmem:[%s13 + $0x40] sm:$0xf]
    %v1723 = vld [vmem:[%s13 + $0x44] sm:$0xf]
    %v1724 = vld [vmem:[%s13 + $0x48] sm:$0xf]
    %v1725 = vld [vmem:[%s13 + $0x4c] sm:$0xf]
    %v1726 = vld [vmem:[%s13 + $0x50] sm:$0xf]
    %v1727 = vld [vmem:[%s13 + $0x54] sm:$0xf]
    %v1728 = vld [vmem:[%s13 + $0x58] sm:$0xf]
    %v1729 = vld [vmem:[%s13 + $0x5c] sm:$0xf]
    %v1730 = vld [vmem:[%s13 + $0x60] sm:$0xf]
    %v1731 = vld [vmem:[%s13 + $0x64] sm:$0xf]
    %v1732 = vld [vmem:[%s13 + $0x68] sm:$0xf]
    %v1733 = vld [vmem:[%s13 + $0x6c] sm:$0xf]
    %v1734 = vld [vmem:[%s13 + $0x70] sm:$0xf]
    %v1735 = vld [vmem:[%s13 + $0x74] sm:$0xf]
    %v1736 = vld [vmem:[%s13 + $0x78] sm:$0xf]
    %v1737 = vld [vmem:[%s13 + $0x7c] sm:$0xf]
    %v1738 = vld [vmem:[%s14] sm:$0x1]
    %v1740 = vperm.slane %v1738, 0
    %v1774 = vunpack.c.l.b16 %v1706
    %v1775 = vunpack.c.l.b16 %v1707
    %v1776 = vunpack.c.l.b16 %v1708
    %v1777 = vunpack.c.l.b16 %v1709
    %v1778 = vunpack.c.l.b16 %v1710
    %v1779 = vunpack.c.l.b16 %v1711
    %v1780 = vunpack.c.l.b16 %v1712
    %v1781 = vunpack.c.l.b16 %v1713
    %v1782 = vunpack.c.l.b16 %v1714
    %v1783 = vunpack.c.l.b16 %v1715
    %v1784 = vunpack.c.l.b16 %v1716
    %v1785 = vunpack.c.l.b16 %v1717
    %v1786 = vunpack.c.l.b16 %v1718
    %v1787 = vunpack.c.l.b16 %v1719
    %v1788 = vunpack.c.l.b16 %v1720
    %v1789 = vunpack.c.l.b16 %v1721
    %v1790 = vunpack.c.l.b16 %v1722
    %v1791 = vunpack.c.l.b16 %v1723
    %v1792 = vunpack.c.l.b16 %v1724
    %v1793 = vunpack.c.l.b16 %v1725
    %v1794 = vunpack.c.l.b16 %v1726
    %v1795 = vunpack.c.l.b16 %v1727
    %v1796 = vunpack.c.l.b16 %v1728
    %v1797 = vunpack.c.l.b16 %v1729
    %v1798 = vunpack.c.l.b16 %v1730
    %v1799 = vunpack.c.l.b16 %v1731
    %v1800 = vunpack.c.l.b16 %v1732
    %v1801 = vunpack.c.l.b16 %v1733
    %v1802 = vunpack.c.l.b16 %v1734
    %v1803 = vunpack.c.l.b16 %v1735
    %v1804 = vunpack.c.l.b16 %v1736
    %v1805 = vunpack.c.l.b16 %v1737
    %v1806 = vpack.c.b16 %v1775, %v1774
    %v1807 = vpack.c.b16 %v1777, %v1776
    %v1808 = vpack.c.b16 %v1779, %v1778
    %v1809 = vpack.c.b16 %v1781, %v1780
    %v1810 = vpack.c.b16 %v1783, %v1782
    %v1811 = vpack.c.b16 %v1785, %v1784
    %v1812 = vpack.c.b16 %v1787, %v1786
    %v1813 = vpack.c.b16 %v1789, %v1788
    %v1814 = vpack.c.b16 %v1791, %v1790
    %v1815 = vpack.c.b16 %v1793, %v1792
    %v1816 = vpack.c.b16 %v1795, %v1794
    %v1817 = vpack.c.b16 %v1797, %v1796
    %v1818 = vpack.c.b16 %v1799, %v1798
    %v1819 = vpack.c.b16 %v1801, %v1800
    %v1820 = vpack.c.b16 %v1803, %v1802
    %v1821 = vpack.c.b16 %v1805, %v1804
    %1838 = vmatpush.bf16.msra.mxu0 %v1813
    %1839 = vmatpush.bf16.msra.mxu0 %v1812
    %1840 = vmatpush.bf16.msra.mxu0 %v1811
    %1841 = vmatpush.bf16.msra.mxu0 %v1810
    %1842 = vmatpush.bf16.msra.mxu0 %v1809
    %1843 = vmatpush.bf16.msra.mxu0 %v1808
    %1844 = vmatpush.bf16.msra.mxu0 %v1807
    %1845 = vmatpush.bf16.msra.mxu0 %v1806
    %1846 = vmatmul.bf16.gmra.mxu0 %v1702
    %v1847 = vpop.f32.mrf.mxu0
    %v1848 = vadd.f32 %v1740, %v1847
    %v1849 = vpop.f32.mrf.mxu0
    %v1850 = vadd.f32 %v1740, %v1849
    %1851 = vmatmul.bf16.gmra.mxu0 %v1704
    %v1852 = vpop.f32.mrf.mxu0
    %v1853 = vadd.f32 %v1740, %v1852
    %v1854 = vpop.f32.mrf.mxu0
    %v1855 = vadd.f32 %v1740, %v1854
    %1856 = vdwg.mxu0
    %1857 = vmatpush.bf16.msra.mxu0 %v1821
    %1858 = vmatpush.bf16.msra.mxu0 %v1820
    %1859 = vmatpush.bf16.msra.mxu0 %v1819
    %1860 = vmatpush.bf16.msra.mxu0 %v1818
    %1861 = vmatpush.bf16.msra.mxu0 %v1817
    %1862 = vmatpush.bf16.msra.mxu0 %v1816
    %1863 = vmatpush.bf16.msra.mxu0 %v1815
    %1864 = vmatpush.bf16.msra.mxu0 %v1814
    %1865 = vmatmul.bf16.gmra.mxu0 %v1703
    %v1866 = vpop.f32.mrf.mxu0
    %v1867 = vadd.f32 %v1848, %v1866
    %v1868 = vpop.f32.mrf.mxu0
    %v1869 = vadd.f32 %v1850, %v1868
    %1870 = vmatmul.bf16.gmra.mxu0 %v1705
    %v1871 = vpop.f32.mrf.mxu0
    %v1872 = vadd.f32 %v1853, %v1871
    %v1873 = vpop.f32.mrf.mxu0
    %v1874 = vadd.f32 %v1855, %v1873
    %1875 = vdwg.mxu0
    %v1876 = vadd.f32 %v1134, %v1867
    %v1877 = vadd.f32 %v1135, %v1869
    %v1878 = vadd.f32 %v1136, %v1872
    %v1879 = vadd.f32 %v1137, %v1874
    %1880 = vst.msk [vmem:[#allocation2] sm:$0xff] %vm86, %v1876
    %1881 = vst.msk [vmem:[#allocation2 + $0x8] sm:$0xff] %vm86, %v1877
    %1882 = vst.msk [vmem:[#allocation2 + $0x10] sm:$0xff] %vm86, %v1878
    %1883 = vst.msk [vmem:[#allocation2 + $0x18] sm:$0xff] %vm86, %v1879
    // Predicated region
    $region62: #{tpu_custom_call.1} parent=1 // pred_check
      _
    $region63: #{tpu_custom_call.1} parent=1 // pred_check_branch
      %1885 = sbr.rel (0) target = $region65
    $region64: #{tpu_custom_call.1} parent=1 // pred_region
      %1887 = vsyncadd [#allocation3], 0
      %s1888 = sshll.u32 [#allocation2], 4
      %s1889 = int_to_ptr.vmem [resolvable:$true] %s1888
      %s1890 = sshll.u32 %s15, 4
      %s1891 = int_to_ptr.hbm [resolvable:$true] %s1890
      %1896 = dma.vmem_to_hbm [thread:$0]  %s1889, 512, %s1891, [#allocation3], 128, 128, 8
    $region65: #{tpu_custom_call.1} parent=1 // pred_fallthru
      _
    // Predicated region
    $region66: #{tpu_custom_call.1} parent=1 // pred_check
      _
    $region67: #{tpu_custom_call.1} parent=1 // pred_check_branch
      %1898 = sbr.rel (0) target = $region69
    $region68: #{tpu_custom_call.1} parent=1 // pred_region
      %1900 = dma.done [#allocation3], 512
    $region69: #{tpu_custom_call.1} parent=1 // pred_fallthru
      _
    %1901 = vsyncpa [#allocation3], 1

</llo_original>
